<compile_context>
chip_gen: v6e
topology: v6e:2x2x1
jax: 0.10.0
libtpu: 0.0.40
codegen_flags: <defaults>
</compile_context>

<pallas_src>
import functools

import jax
import jax.numpy as jnp
from jax.experimental import pallas as pl
from jax.experimental.pallas import tpu as pltpu

BN_EPS = 1e-5
LANE = 128      # pad every feature axis to one full lane width
VEC_ROWS = 8    # packed per-layer vectors padded to a full sublane tile


# ----------------------------------------------------------------------------
# Fused Pallas kernel: all GIN layers in one invocation.
# Everything (x, adj, stacked weights) lives as full VMEM blocks (< 1.5 MiB).
# ----------------------------------------------------------------------------
def fused_gin_kernel(x_ref, adj_ref, w1_ref, w2_ref, vec_ref, o_ref, *, num_layers):
    x = x_ref[...]          # (Np, 128)  lane-dense node features
    adj = adj_ref[...]      # (Np, Np)   adjacency with folded residual (Adj + I)
    for l in range(num_layers):                 # static unroll (L = 5)
        vec = vec_ref[l]                        # (8, 128): b1, b2, scale, shift, 0..
        # aggregation + residual in one MXU matmul
        h = jnp.dot(adj, x, preferred_element_type=jnp.float32)
        # GIN MLP: Linear -> ReLU -> Linear
        h = jnp.dot(h, w1_ref[l], preferred_element_type=jnp.float32) + vec[0:1]
        h = jnp.maximum(h, 0.0)
        h = jnp.dot(h, w2_ref[l], preferred_element_type=jnp.float32) + vec[1:2]
        # F.relu(conv(x, edge_index))
        h = jnp.maximum(h, 0.0)
        # BatchNorm1d eval, pre-folded into scale/shift (padded lanes stay 0)
        x = h * vec[2:3] + vec[3:4]
    o_ref[...] = x


# ----------------------------------------------------------------------------
# Parameter construction (deterministic, synthetic).
# ----------------------------------------------------------------------------
def make_layer_params(key, f_in, f_hidden, f_out):
    ks = jax.random.split(key, 8)

    def lin(kw, fan_in, fan_out):
        bound = 1.0 / jnp.sqrt(jnp.float32(fan_in))
        return jax.random.uniform(kw, (fan_in, fan_out), jnp.float32, -bound, bound)

    w1 = lin(ks[0], f_in, f_hidden)
    b1 = jax.random.uniform(ks[1], (1, f_hidden), jnp.float32, -0.1, 0.1)
    w2 = lin(ks[2], f_hidden, f_out)
    b2 = jax.random.uniform(ks[3], (1, f_out), jnp.float32, -0.1, 0.1)
    gamma = 1.0 + 0.1 * jax.random.normal(ks[4], (1, f_out), jnp.float32)
    beta = 0.1 * jax.random.normal(ks[5], (1, f_out), jnp.float32)
    mean = 0.1 * jax.random.normal(ks[6], (1, f_out), jnp.float32)
    var = jnp.abs(1.0 + 0.1 * jax.random.normal(ks[7], (1, f_out), jnp.float32))
    return dict(w1=w1, b1=b1, w2=w2, b2=b2,
                gamma=gamma, beta=beta, mean=mean, var=var)


# ----------------------------------------------------------------------------
# Full encoder forward (setting='node'):
#   x -> one_hot -> 4x (GIN(dim)+ReLU+BN(dim)) -> GIN(->2)+ReLU+BN(2)
# ----------------------------------------------------------------------------
def gin_mlp_encoder_forward(labels, edge_index, params, num_features):
    del num_features  # labels are one-hot encoded directly into the padded lane width
    n = labels.shape[0]
    n_pad = max(8, -(-n // 8) * 8)      # sublane-align the node axis
    num_layers = len(params)
    out_dim = params[-1]['w2'].shape[1]

    # --- glue (plain JAX) ----------------------------------------------------
    # one-hot node labels directly into the 128-wide padded feature space
    x = jax.nn.one_hot(labels.astype(jnp.int32), LANE, dtype=jnp.float32)
    x = jnp.pad(x, ((0, n_pad - n), (0, 0)))

    # dense adjacency Adj[target, source] with the GIN residual folded in (Adj + I)
    src, tgt = edge_index[0], edge_index[1]
    adj = jnp.zeros((n_pad, n_pad), jnp.float32).at[tgt, src].add(1.0)
    adj = adj + jnp.eye(n_pad, dtype=jnp.float32)

    # stack per-layer params, zero-padded so padded lanes stay exactly 0
    def pad_w(w):
        fi, fo = w.shape
        return jnp.pad(w, ((0, LANE - fi), (0, LANE - fo)))

    def pad_v(v):
        return jnp.pad(v, ((0, 0), (0, LANE - v.shape[1])))

    w1 = jnp.stack([pad_w(p['w1']) for p in params])          # (L, 128, 128)
    w2 = jnp.stack([pad_w(p['w2']) for p in params])          # (L, 128, 128)

    # pack b1 / b2 / BN-scale / BN-shift into one (L, 8, 128) array
    vec_layers = []
    for p in params:
        s = p['gamma'] * jax.lax.rsqrt(p['var'] + BN_EPS)
        vec_layers.append(jnp.concatenate([
            pad_v(p['b1']),                                   # row 0: b1
            pad_v(p['b2']),                                   # row 1: b2
            pad_v(s),                                         # row 2: BN scale
            pad_v(p['beta'] - p['mean'] * s),                 # row 3: BN shift
            jnp.zeros((VEC_ROWS - 4, LANE), jnp.float32),     # rows 4..7: pad
        ], axis=0))
    vec = jnp.stack(vec_layers)                               # (L, 8, 128)

    # --- single fused Pallas call --------------------------------------------
    # TODO(synk): for large graphs the dense (N,N) adjacency must be tiled with a
    # pipelined grid (BlockSpec over N, f32 accumulator) instead of one VMEM block.
    vmem = pl.BlockSpec(memory_space=pltpu.MemorySpace.VMEM)
    out = pl.pallas_call(
        functools.partial(fused_gin_kernel, num_layers=num_layers),
        out_shape=jax.ShapeDtypeStruct((n_pad, LANE), jnp.float32),
        in_specs=[vmem] * 5,
        out_specs=vmem,
    )(x, adj, w1, w2, vec)

    # slice the real nodes / real output channels outside the kernel
    return out[:n, :out_dim]  # setting == 'node' returns the BN5 output directly


# Pure-JAX reference for verification (mirrors the PyTorch module exactly).
def reference_forward(labels, edge_index, params, num_features):
    n = labels.shape[0]
    x = jax.nn.one_hot(labels.astype(jnp.int32), num_features, dtype=jnp.float32)
    src, tgt = edge_index[0], edge_index[1]
    adj = jnp.zeros((n, n), jnp.float32).at[tgt, src].add(1.0)
    for p in params:
        h = x + adj @ x
        h = jnp.maximum(h @ p['w1'] + p['b1'], 0.0)
        h = h @ p['w2'] + p['b2']
        h = jnp.maximum(h, 0.0)
        x = (h - p['mean']) * jax.lax.rsqrt(p['var'] + BN_EPS) * p['gamma'] + p['beta']
    return x


if __name__ == "__main__":
    num_features = 8   # number of distinct node labels (one-hot width)
    dim = 32           # GIN hidden dim
    out_dim = 2        # setting == 'node' -> last layer maps to 2
    n_nodes = 16
    n_edges = 32

    key = jax.random.PRNGKey(0)
    k_lbl, k_src, k_tgt, k_par = jax.random.split(key, 4)

    labels = jax.random.randint(k_lbl, (n_nodes,), 0, num_features, dtype=jnp.int32)
    edge_index = jnp.stack([
        jax.random.randint(k_src, (n_edges,), 0, n_nodes, dtype=jnp.int32),
        jax.random.randint(k_tgt, (n_edges,), 0, n_nodes, dtype=jnp.int32),
    ], axis=0)

    layer_dims = [(num_features, dim, dim),
                  (dim, dim, dim),
                  (dim, dim, dim),
                  (dim, dim, dim),
                  (dim, dim, out_dim)]
    pkeys = jax.random.split(k_par, len(layer_dims))
    params = [make_layer_params(pk, fi, fh, fo)
              for pk, (fi, fh, fo) in zip(pkeys, layer_dims)]

    fwd = jax.jit(functools.partial(gin_mlp_encoder_forward,
                                    num_features=num_features))
    out = fwd(labels, edge_index, params)
    out = jax.block_until_ready(out)

    ref = reference_forward(labels, edge_index, params, num_features)
    assert out.shape == (n_nodes, out_dim)
    assert jnp.allclose(out, ref, atol=1e-4, rtol=1e-4), "mismatch vs reference"

    print("KERNEL_OK")
</pallas_src>

<mosaic_0001>
module attributes {stable_mosaic.version = 11 : i64} {
  func.func private @main(%arg0: i32) attributes {dimension_semantics = [#tpu.dimension_semantics<core_parallel>], iteration_bounds = array<i64: 2>, tpu.core_type = #tpu.core_type<sc_scalar_subcore>, window_params = []} {
    return
  }
}

module attributes {stable_mosaic.version = 11 : i64} {
  func.func private @main(%arg0: i32) attributes {dimension_semantics = [#tpu.dimension_semantics<core_parallel>], iteration_bounds = array<i64: 2>, tpu.core_type = #tpu.core_type<sc_scalar_subcore>, window_params = []} {
    return
  }
}

module attributes {stable_mosaic.version = 11 : i64} {
  func.func @fused_gin_kernel(%arg0: memref<16x128xf32, #tpu.memory_space<vmem>>, %arg1: memref<16x16xf32, #tpu.memory_space<vmem>>, %arg2: memref<5x128x128xf32, #tpu.memory_space<vmem>>, %arg3: memref<5x128x128xf32, #tpu.memory_space<vmem>>, %arg4: memref<5x8x128xf32, #tpu.memory_space<vmem>>, %arg5: memref<16x128xf32, #tpu.memory_space<vmem>>) attributes {dimension_semantics = [], scalar_prefetch = 0 : i64, scratch_operands = 0 : i64, tpu.core_type = #tpu.core_type<tc>} {
    %c0 = arith.constant 0 : index
    %c0_0 = arith.constant 0 : index
    %0 = vector.load %arg0[%c0, %c0_0] : memref<16x128xf32, #tpu.memory_space<vmem>>, vector<16x128xf32>
    %c0_1 = arith.constant 0 : index
    %c0_2 = arith.constant 0 : index
    %1 = vector.load %arg1[%c0_1, %c0_2] : memref<16x16xf32, #tpu.memory_space<vmem>>, vector<16x16xf32>
    %c0_3 = arith.constant 0 : index
    %c0_4 = arith.constant 0 : index
    %c0_5 = arith.constant 0 : index
    %2 = vector.load %arg4[%c0_3, %c0_4, %c0_5] : memref<5x8x128xf32, #tpu.memory_space<vmem>>, vector<1x8x128xf32>
    %3 = vector.shape_cast %2 : vector<1x8x128xf32> to vector<8x128xf32>
    %cst = arith.constant dense<0.000000e+00> : vector<16x128xf32>
    %4 = tpu.matmul %1, %0, %cst {dimension_numbers = #tpu.dot_dimension_numbers<[1], [0], [0], [1], [0, 0, 1, 1], [], []>} : vector<16x16xf32>, vector<16x128xf32>, vector<16x128xf32> -> vector<16x128xf32>
    %c0_6 = arith.constant 0 : index
    %c0_7 = arith.constant 0 : index
    %c0_8 = arith.constant 0 : index
    %5 = vector.load %arg2[%c0_6, %c0_7, %c0_8] : memref<5x128x128xf32, #tpu.memory_space<vmem>>, vector<1x128x128xf32>
    %6 = vector.shape_cast %5 : vector<1x128x128xf32> to vector<128x128xf32>
    %cst_9 = arith.constant dense<0.000000e+00> : vector<16x128xf32>
    %7 = tpu.matmul %4, %6, %cst_9 {dimension_numbers = #tpu.dot_dimension_numbers<[1], [0], [0], [1], [0, 0, 1, 1], [], []>} : vector<16x128xf32>, vector<128x128xf32>, vector<16x128xf32> -> vector<16x128xf32>
    %8 = vector.extract_strided_slice %3 {offsets = [0, 0], sizes = [1, 128], strides = [1, 1]} : vector<8x128xf32> to vector<1x128xf32>
    %9 = vector.broadcast %8 : vector<1x128xf32> to vector<16x128xf32>
    %10 = arith.addf %7, %9 : vector<16x128xf32>
    %cst_10 = arith.constant 0.000000e+00 : f32
    %11 = vector.broadcast %cst_10 : f32 to vector<16x128xf32>
    %12 = arith.maximumf %10, %11 : vector<16x128xf32>
    %c0_11 = arith.constant 0 : index
    %c0_12 = arith.constant 0 : index
    %c0_13 = arith.constant 0 : index
    %13 = vector.load %arg3[%c0_11, %c0_12, %c0_13] : memref<5x128x128xf32, #tpu.memory_space<vmem>>, vector<1x128x128xf32>
    %14 = vector.shape_cast %13 : vector<1x128x128xf32> to vector<128x128xf32>
    %cst_14 = arith.constant dense<0.000000e+00> : vector<16x128xf32>
    %15 = tpu.matmul %12, %14, %cst_14 {dimension_numbers = #tpu.dot_dimension_numbers<[1], [0], [0], [1], [0, 0, 1, 1], [], []>} : vector<16x128xf32>, vector<128x128xf32>, vector<16x128xf32> -> vector<16x128xf32>
    %16 = vector.extract_strided_slice %3 {offsets = [1, 0], sizes = [1, 128], strides = [1, 1]} : vector<8x128xf32> to vector<1x128xf32>
    %17 = vector.broadcast %16 : vector<1x128xf32> to vector<16x128xf32>
    %18 = arith.addf %15, %17 : vector<16x128xf32>
    %cst_15 = arith.constant 0.000000e+00 : f32
    %19 = vector.broadcast %cst_15 : f32 to vector<16x128xf32>
    %20 = arith.maximumf %18, %19 : vector<16x128xf32>
    %21 = vector.extract_strided_slice %3 {offsets = [2, 0], sizes = [1, 128], strides = [1, 1]} : vector<8x128xf32> to vector<1x128xf32>
    %22 = vector.broadcast %21 : vector<1x128xf32> to vector<16x128xf32>
    %23 = arith.mulf %20, %22 : vector<16x128xf32>
    %24 = vector.extract_strided_slice %3 {offsets = [3, 0], sizes = [1, 128], strides = [1, 1]} : vector<8x128xf32> to vector<1x128xf32>
    %25 = vector.broadcast %24 : vector<1x128xf32> to vector<16x128xf32>
    %26 = arith.addf %23, %25 : vector<16x128xf32>
    %c1 = arith.constant 1 : index
    %c0_16 = arith.constant 0 : index
    %c0_17 = arith.constant 0 : index
    %27 = vector.load %arg4[%c1, %c0_16, %c0_17] : memref<5x8x128xf32, #tpu.memory_space<vmem>>, vector<1x8x128xf32>
    %28 = vector.shape_cast %27 : vector<1x8x128xf32> to vector<8x128xf32>
    %cst_18 = arith.constant dense<0.000000e+00> : vector<16x128xf32>
    %29 = tpu.matmul %1, %26, %cst_18 {dimension_numbers = #tpu.dot_dimension_numbers<[1], [0], [0], [1], [0, 0, 1, 1], [], []>} : vector<16x16xf32>, vector<16x128xf32>, vector<16x128xf32> -> vector<16x128xf32>
    %c1_19 = arith.constant 1 : index
    %c0_20 = arith.constant 0 : index
    %c0_21 = arith.constant 0 : index
    %30 = vector.load %arg2[%c1_19, %c0_20, %c0_21] : memref<5x128x128xf32, #tpu.memory_space<vmem>>, vector<1x128x128xf32>
    %31 = vector.shape_cast %30 : vector<1x128x128xf32> to vector<128x128xf32>
    %cst_22 = arith.constant dense<0.000000e+00> : vector<16x128xf32>
    %32 = tpu.matmul %29, %31, %cst_22 {dimension_numbers = #tpu.dot_dimension_numbers<[1], [0], [0], [1], [0, 0, 1, 1], [], []>} : vector<16x128xf32>, vector<128x128xf32>, vector<16x128xf32> -> vector<16x128xf32>
    %33 = vector.extract_strided_slice %28 {offsets = [0, 0], sizes = [1, 128], strides = [1, 1]} : vector<8x128xf32> to vector<1x128xf32>
    %34 = vector.broadcast %33 : vector<1x128xf32> to vector<16x128xf32>
    %35 = arith.addf %32, %34 : vector<16x128xf32>
    %cst_23 = arith.constant 0.000000e+00 : f32
    %36 = vector.broadcast %cst_23 : f32 to vector<16x128xf32>
    %37 = arith.maximumf %35, %36 : vector<16x128xf32>
    %c1_24 = arith.constant 1 : index
    %c0_25 = arith.constant 0 : index
    %c0_26 = arith.constant 0 : index
    %38 = vector.load %arg3[%c1_24, %c0_25, %c0_26] : memref<5x128x128xf32, #tpu.memory_space<vmem>>, vector<1x128x128xf32>
    %39 = vector.shape_cast %38 : vector<1x128x128xf32> to vector<128x128xf32>
    %cst_27 = arith.constant dense<0.000000e+00> : vector<16x128xf32>
    %40 = tpu.matmul %37, %39, %cst_27 {dimension_numbers = #tpu.dot_dimension_numbers<[1], [0], [0], [1], [0, 0, 1, 1], [], []>} : vector<16x128xf32>, vector<128x128xf32>, vector<16x128xf32> -> vector<16x128xf32>
    %41 = vector.extract_strided_slice %28 {offsets = [1, 0], sizes = [1, 128], strides = [1, 1]} : vector<8x128xf32> to vector<1x128xf32>
    %42 = vector.broadcast %41 : vector<1x128xf32> to vector<16x128xf32>
    %43 = arith.addf %40, %42 : vector<16x128xf32>
    %cst_28 = arith.constant 0.000000e+00 : f32
    %44 = vector.broadcast %cst_28 : f32 to vector<16x128xf32>
    %45 = arith.maximumf %43, %44 : vector<16x128xf32>
    %46 = vector.extract_strided_slice %28 {offsets = [2, 0], sizes = [1, 128], strides = [1, 1]} : vector<8x128xf32> to vector<1x128xf32>
    %47 = vector.broadcast %46 : vector<1x128xf32> to vector<16x128xf32>
    %48 = arith.mulf %45, %47 : vector<16x128xf32>
    %49 = vector.extract_strided_slice %28 {offsets = [3, 0], sizes = [1, 128], strides = [1, 1]} : vector<8x128xf32> to vector<1x128xf32>
    %50 = vector.broadcast %49 : vector<1x128xf32> to vector<16x128xf32>
    %51 = arith.addf %48, %50 : vector<16x128xf32>
    %c2 = arith.constant 2 : index
    %c0_29 = arith.constant 0 : index
    %c0_30 = arith.constant 0 : index
    %52 = vector.load %arg4[%c2, %c0_29, %c0_30] : memref<5x8x128xf32, #tpu.memory_space<vmem>>, vector<1x8x128xf32>
    %53 = vector.shape_cast %52 : vector<1x8x128xf32> to vector<8x128xf32>
    %cst_31 = arith.constant dense<0.000000e+00> : vector<16x128xf32>
    %54 = tpu.matmul %1, %51, %cst_31 {dimension_numbers = #tpu.dot_dimension_numbers<[1], [0], [0], [1], [0, 0, 1, 1], [], []>} : vector<16x16xf32>, vector<16x128xf32>, vector<16x128xf32> -> vector<16x128xf32>
    %c2_32 = arith.constant 2 : index
    %c0_33 = arith.constant 0 : index
    %c0_34 = arith.constant 0 : index
    %55 = vector.load %arg2[%c2_32, %c0_33, %c0_34] : memref<5x128x128xf32, #tpu.memory_space<vmem>>, vector<1x128x128xf32>
    %56 = vector.shape_cast %55 : vector<1x128x128xf32> to vector<128x128xf32>
    %cst_35 = arith.constant dense<0.000000e+00> : vector<16x128xf32>
    %57 = tpu.matmul %54, %56, %cst_35 {dimension_numbers = #tpu.dot_dimension_numbers<[1], [0], [0], [1], [0, 0, 1, 1], [], []>} : vector<16x128xf32>, vector<128x128xf32>, vector<16x128xf32> -> vector<16x128xf32>
    %58 = vector.extract_strided_slice %53 {offsets = [0, 0], sizes = [1, 128], strides = [1, 1]} : vector<8x128xf32> to vector<1x128xf32>
    %59 = vector.broadcast %58 : vector<1x128xf32> to vector<16x128xf32>
    %60 = arith.addf %57, %59 : vector<16x128xf32>
    %cst_36 = arith.constant 0.000000e+00 : f32
    %61 = vector.broadcast %cst_36 : f32 to vector<16x128xf32>
    %62 = arith.maximumf %60, %61 : vector<16x128xf32>
    %c2_37 = arith.constant 2 : index
    %c0_38 = arith.constant 0 : index
    %c0_39 = arith.constant 0 : index
    %63 = vector.load %arg3[%c2_37, %c0_38, %c0_39] : memref<5x128x128xf32, #tpu.memory_space<vmem>>, vector<1x128x128xf32>
    %64 = vector.shape_cast %63 : vector<1x128x128xf32> to vector<128x128xf32>
    %cst_40 = arith.constant dense<0.000000e+00> : vector<16x128xf32>
    %65 = tpu.matmul %62, %64, %cst_40 {dimension_numbers = #tpu.dot_dimension_numbers<[1], [0], [0], [1], [0, 0, 1, 1], [], []>} : vector<16x128xf32>, vector<128x128xf32>, vector<16x128xf32> -> vector<16x128xf32>
    %66 = vector.extract_strided_slice %53 {offsets = [1, 0], sizes = [1, 128], strides = [1, 1]} : vector<8x128xf32> to vector<1x128xf32>
    %67 = vector.broadcast %66 : vector<1x128xf32> to vector<16x128xf32>
    %68 = arith.addf %65, %67 : vector<16x128xf32>
    %cst_41 = arith.constant 0.000000e+00 : f32
    %69 = vector.broadcast %cst_41 : f32 to vector<16x128xf32>
    %70 = arith.maximumf %68, %69 : vector<16x128xf32>
    %71 = vector.extract_strided_slice %53 {offsets = [2, 0], sizes = [1, 128], strides = [1, 1]} : vector<8x128xf32> to vector<1x128xf32>
    %72 = vector.broadcast %71 : vector<1x128xf32> to vector<16x128xf32>
    %73 = arith.mulf %70, %72 : vector<16x128xf32>
    %74 = vector.extract_strided_slice %53 {offsets = [3, 0], sizes = [1, 128], strides = [1, 1]} : vector<8x128xf32> to vector<1x128xf32>
    %75 = vector.broadcast %74 : vector<1x128xf32> to vector<16x128xf32>
    %76 = arith.addf %73, %75 : vector<16x128xf32>
    %c3 = arith.constant 3 : index
    %c0_42 = arith.constant 0 : index
    %c0_43 = arith.constant 0 : index
    %77 = vector.load %arg4[%c3, %c0_42, %c0_43] : memref<5x8x128xf32, #tpu.memory_space<vmem>>, vector<1x8x128xf32>
    %78 = vector.shape_cast %77 : vector<1x8x128xf32> to vector<8x128xf32>
    %cst_44 = arith.constant dense<0.000000e+00> : vector<16x128xf32>
    %79 = tpu.matmul %1, %76, %cst_44 {dimension_numbers = #tpu.dot_dimension_numbers<[1], [0], [0], [1], [0, 0, 1, 1], [], []>} : vector<16x16xf32>, vector<16x128xf32>, vector<16x128xf32> -> vector<16x128xf32>
    %c3_45 = arith.constant 3 : index
    %c0_46 = arith.constant 0 : index
    %c0_47 = arith.constant 0 : index
    %80 = vector.load %arg2[%c3_45, %c0_46, %c0_47] : memref<5x128x128xf32, #tpu.memory_space<vmem>>, vector<1x128x128xf32>
    %81 = vector.shape_cast %80 : vector<1x128x128xf32> to vector<128x128xf32>
    %cst_48 = arith.constant dense<0.000000e+00> : vector<16x128xf32>
    %82 = tpu.matmul %79, %81, %cst_48 {dimension_numbers = #tpu.dot_dimension_numbers<[1], [0], [0], [1], [0, 0, 1, 1], [], []>} : vector<16x128xf32>, vector<128x128xf32>, vector<16x128xf32> -> vector<16x128xf32>
    %83 = vector.extract_strided_slice %78 {offsets = [0, 0], sizes = [1, 128], strides = [1, 1]} : vector<8x128xf32> to vector<1x128xf32>
    %84 = vector.broadcast %83 : vector<1x128xf32> to vector<16x128xf32>
    %85 = arith.addf %82, %84 : vector<16x128xf32>
    %cst_49 = arith.constant 0.000000e+00 : f32
    %86 = vector.broadcast %cst_49 : f32 to vector<16x128xf32>
    %87 = arith.maximumf %85, %86 : vector<16x128xf32>
    %c3_50 = arith.constant 3 : index
    %c0_51 = arith.constant 0 : index
    %c0_52 = arith.constant 0 : index
    %88 = vector.load %arg3[%c3_50, %c0_51, %c0_52] : memref<5x128x128xf32, #tpu.memory_space<vmem>>, vector<1x128x128xf32>
    %89 = vector.shape_cast %88 : vector<1x128x128xf32> to vector<128x128xf32>
    %cst_53 = arith.constant dense<0.000000e+00> : vector<16x128xf32>
    %90 = tpu.matmul %87, %89, %cst_53 {dimension_numbers = #tpu.dot_dimension_numbers<[1], [0], [0], [1], [0, 0, 1, 1], [], []>} : vector<16x128xf32>, vector<128x128xf32>, vector<16x128xf32> -> vector<16x128xf32>
    %91 = vector.extract_strided_slice %78 {offsets = [1, 0], sizes = [1, 128], strides = [1, 1]} : vector<8x128xf32> to vector<1x128xf32>
    %92 = vector.broadcast %91 : vector<1x128xf32> to vector<16x128xf32>
    %93 = arith.addf %90, %92 : vector<16x128xf32>
    %cst_54 = arith.constant 0.000000e+00 : f32
    %94 = vector.broadcast %cst_54 : f32 to vector<16x128xf32>
    %95 = arith.maximumf %93, %94 : vector<16x128xf32>
    %96 = vector.extract_strided_slice %78 {offsets = [2, 0], sizes = [1, 128], strides = [1, 1]} : vector<8x128xf32> to vector<1x128xf32>
    %97 = vector.broadcast %96 : vector<1x128xf32> to vector<16x128xf32>
    %98 = arith.mulf %95, %97 : vector<16x128xf32>
    %99 = vector.extract_strided_slice %78 {offsets = [3, 0], sizes = [1, 128], strides = [1, 1]} : vector<8x128xf32> to vector<1x128xf32>
    %100 = vector.broadcast %99 : vector<1x128xf32> to vector<16x128xf32>
    %101 = arith.addf %98, %100 : vector<16x128xf32>
    %c4 = arith.constant 4 : index
    %c0_55 = arith.constant 0 : index
    %c0_56 = arith.constant 0 : index
    %102 = vector.load %arg4[%c4, %c0_55, %c0_56] : memref<5x8x128xf32, #tpu.memory_space<vmem>>, vector<1x8x128xf32>
    %103 = vector.shape_cast %102 : vector<1x8x128xf32> to vector<8x128xf32>
    %cst_57 = arith.constant dense<0.000000e+00> : vector<16x128xf32>
    %104 = tpu.matmul %1, %101, %cst_57 {dimension_numbers = #tpu.dot_dimension_numbers<[1], [0], [0], [1], [0, 0, 1, 1], [], []>} : vector<16x16xf32>, vector<16x128xf32>, vector<16x128xf32> -> vector<16x128xf32>
    %c4_58 = arith.constant 4 : index
    %c0_59 = arith.constant 0 : index
    %c0_60 = arith.constant 0 : index
    %105 = vector.load %arg2[%c4_58, %c0_59, %c0_60] : memref<5x128x128xf32, #tpu.memory_space<vmem>>, vector<1x128x128xf32>
    %106 = vector.shape_cast %105 : vector<1x128x128xf32> to vector<128x128xf32>
    %cst_61 = arith.constant dense<0.000000e+00> : vector<16x128xf32>
    %107 = tpu.matmul %104, %106, %cst_61 {dimension_numbers = #tpu.dot_dimension_numbers<[1], [0], [0], [1], [0, 0, 1, 1], [], []>} : vector<16x128xf32>, vector<128x128xf32>, vector<16x128xf32> -> vector<16x128xf32>
    %108 = vector.extract_strided_slice %103 {offsets = [0, 0], sizes = [1, 128], strides = [1, 1]} : vector<8x128xf32> to vector<1x128xf32>
    %109 = vector.broadcast %108 : vector<1x128xf32> to vector<16x128xf32>
    %110 = arith.addf %107, %109 : vector<16x128xf32>
    %cst_62 = arith.constant 0.000000e+00 : f32
    %111 = vector.broadcast %cst_62 : f32 to vector<16x128xf32>
    %112 = arith.maximumf %110, %111 : vector<16x128xf32>
    %c4_63 = arith.constant 4 : index
    %c0_64 = arith.constant 0 : index
    %c0_65 = arith.constant 0 : index
    %113 = vector.load %arg3[%c4_63, %c0_64, %c0_65] : memref<5x128x128xf32, #tpu.memory_space<vmem>>, vector<1x128x128xf32>
    %114 = vector.shape_cast %113 : vector<1x128x128xf32> to vector<128x128xf32>
    %cst_66 = arith.constant dense<0.000000e+00> : vector<16x128xf32>
    %115 = tpu.matmul %112, %114, %cst_66 {dimension_numbers = #tpu.dot_dimension_numbers<[1], [0], [0], [1], [0, 0, 1, 1], [], []>} : vector<16x128xf32>, vector<128x128xf32>, vector<16x128xf32> -> vector<16x128xf32>
    %116 = vector.extract_strided_slice %103 {offsets = [1, 0], sizes = [1, 128], strides = [1, 1]} : vector<8x128xf32> to vector<1x128xf32>
    %117 = vector.broadcast %116 : vector<1x128xf32> to vector<16x128xf32>
    %118 = arith.addf %115, %117 : vector<16x128xf32>
    %cst_67 = arith.constant 0.000000e+00 : f32
    %119 = vector.broadcast %cst_67 : f32 to vector<16x128xf32>
    %120 = arith.maximumf %118, %119 : vector<16x128xf32>
    %121 = vector.extract_strided_slice %103 {offsets = [2, 0], sizes = [1, 128], strides = [1, 1]} : vector<8x128xf32> to vector<1x128xf32>
    %122 = vector.broadcast %121 : vector<1x128xf32> to vector<16x128xf32>
    %123 = arith.mulf %120, %122 : vector<16x128xf32>
    %124 = vector.extract_strided_slice %103 {offsets = [3, 0], sizes = [1, 128], strides = [1, 1]} : vector<8x128xf32> to vector<1x128xf32>
    %125 = vector.broadcast %124 : vector<1x128xf32> to vector<16x128xf32>
    %126 = arith.addf %123, %125 : vector<16x128xf32>
    %c0_68 = arith.constant 0 : index
    %c0_69 = arith.constant 0 : index
    %127 = vector.load %arg5[%c0_68, %c0_69] : memref<16x128xf32, #tpu.memory_space<vmem>>, vector<16x128xf32>
    tpu.vector_store %arg5[%c0_68, %c0_69], %126 {strides = array<i32>} : memref<16x128xf32, #tpu.memory_space<vmem>>, vector<16x128xf32>,
    return
  }
}

</mosaic_0001>

<llo_original>
// kernel: gin_mlp_encoder_forward.1
$region0: #{gin_mlp_encoder_forward.1}
  #allocation0 [shape = 'u32[]', space=smem, size = 0x4, offset = 0x4, fixed_abs, tag = 'smem constant byte address 0x4 - core index']
  #allocation1 [shape = 'u32[144,128]{1,0:T(1,128)}', space=vmem, size = 0x12000, scoped, tag = 'internal scratch']
  %s0 = inlined_call_operand.vmem [shape: f32[16,128], index: 0, kind: input, shape index: {}]
  %s1 = inlined_call_operand.hbm [shape: f32[16,16], index: 1, kind: input, shape index: {}]
  %s2 = inlined_call_operand.vmem [shape: f32[5,128,128], index: 2, kind: input, shape index: {}]
  %s3 = inlined_call_operand.vmem [shape: f32[5,128,128], index: 3, kind: input, shape index: {}]
  %s4 = inlined_call_operand.vmem [shape: f32[5,8,128], index: 4, kind: input, shape index: {}]
  %s5 = inlined_call_operand.vmem [shape: f32[16,128], index: 5, kind: output, shape index: {}]
  %s6 = sld [smem:[#allocation0]]
  $region34: #{gin_mlp_encoder_forward.1} parent=0
    _
  %s8 = ssub.s32 1, %s6
  %s9 = scalar_select 0, %s8, %s6
  $region1: #{gin_mlp_encoder_forward.1} parent=0
    #allocation2 [shape = 'u8[8192]{0}', space=vmem, size = 0x2000, scoped, tag = 'input window, operand 1, single buffered']
    #allocation3 [shape = 's32[1]{0}', space=sflag, size = 0x4, scoped, tag = 'scoped memory for gin_mlp_encoder_forward.1']
    %10 = vsyncpa [#allocation3], 0
    // Predicated region
    $region2: #{gin_mlp_encoder_forward.1} parent=1 // pred_check
      _
    $region3: #{gin_mlp_encoder_forward.1} parent=1 // pred_check_branch
      %12 = sbr.rel (0) target = $region5
    $region4: #{gin_mlp_encoder_forward.1} parent=1 // pred_region
      _
    $region5: #{gin_mlp_encoder_forward.1} parent=1 // pred_fallthru
      _
    // Predicated region
    $region6: #{gin_mlp_encoder_forward.1} parent=1 // pred_check
      _
    $region7: #{gin_mlp_encoder_forward.1} parent=1 // pred_check_branch
      %14 = sbr.rel (0) target = $region9
    $region8: #{gin_mlp_encoder_forward.1} parent=1 // pred_region
      %s16 = ssub.s32 256, 256
      %17 = vsyncadd [#allocation3], %s16
      %s18 = sshll.u32 [#allocation2], 4
      %s19 = int_to_ptr.vmem [resolvable:$true] %s18
      %24 = dma.hbm_to_vmem [thread:$0]  %s1, 256, %s19, [#allocation3], 128, 128, 8
    $region9: #{gin_mlp_encoder_forward.1} parent=1 // pred_fallthru
      _
    // Predicated region
    $region10: #{gin_mlp_encoder_forward.1} parent=1 // pred_check
      _
    $region11: #{gin_mlp_encoder_forward.1} parent=1 // pred_check_branch
      %26 = sbr.rel (0) target = $region13
    $region12: #{gin_mlp_encoder_forward.1} parent=1 // pred_region
      _
    $region13: #{gin_mlp_encoder_forward.1} parent=1 // pred_fallthru
      _
    // Predicated region
    $region14: #{gin_mlp_encoder_forward.1} parent=1 // pred_check
      _
    $region15: #{gin_mlp_encoder_forward.1} parent=1 // pred_check_branch
      %28 = sbr.rel (0) target = $region17
    $region16: #{gin_mlp_encoder_forward.1} parent=1 // pred_region
      _
    $region17: #{gin_mlp_encoder_forward.1} parent=1 // pred_fallthru
      _
    // Predicated region
    $region18: #{gin_mlp_encoder_forward.1} parent=1 // pred_check
      _
    $region19: #{gin_mlp_encoder_forward.1} parent=1 // pred_check_branch
      %30 = sbr.rel (0) target = $region21
    $region20: #{gin_mlp_encoder_forward.1} parent=1 // pred_region
      _
    $region21: #{gin_mlp_encoder_forward.1} parent=1 // pred_fallthru
      _
    // Predicated region
    $region22: #{gin_mlp_encoder_forward.1} parent=1 // pred_check
      _
    $region23: #{gin_mlp_encoder_forward.1} parent=1 // pred_check_branch
      %32 = sbr.rel (0) target = $region25
    $region24: #{gin_mlp_encoder_forward.1} parent=1 // pred_region
      %33 = dma.done [#allocation3], 256
    $region25: #{gin_mlp_encoder_forward.1} parent=1 // pred_fallthru
      _
    %v34 = vld [vmem:[%s0] sm:$0xff]
    %v35 = vld [vmem:[%s0 + $0x8] sm:$0xff]
    %v36 = vld [vmem:[#allocation2] sm:$0xff]
    %v37 = vld [vmem:[#allocation2 + $0x8] sm:$0xff]
    %v38 = vld [vmem:[%s4] sm:$0xff]
    %vm39 = vcmask 130048
    %v41 = vsel %vm39, %v36, 0
    %v44 = vsel %vm39, %v37, 0
    %46 = vmatprep.subr.mxu0 0.0
    %47 = vmatpush1.msra.mxu0 0.0
    %48 = vmatprep.subr.mxu0 0.0
    %49 = vmatpush1.msra.mxu0 0.0
    %50 = vmatprep.subr.mxu0 0.0
    %51 = vmatpush1.msra.mxu0 0.0
    %52 = vmatprep.subr.mxu0 0.0
    %53 = vmatpush1.msra.mxu0 0.0
    %54 = vmatprep.subr.mxu0 0.0
    %55 = vmatpush1.msra.mxu0 0.0
    %56 = vmatprep.subr.mxu0 0.0
    %57 = vmatpush1.msra.mxu0 0.0
    %58 = vmatprep.subr.mxu0 0.0
    %59 = vmatpush1.msra.mxu0 0.0
    %60 = vmatprep.subr.mxu0 0.0
    %61 = vmatpush1.msra.mxu0 0.0
    %62 = vmatprep.subr.mxu0 0.0
    %63 = vmatpush1.msra.mxu0 0.0
    %64 = vmatprep.subr.mxu0 0.0
    %65 = vmatpush1.msra.mxu0 0.0
    %66 = vmatprep.subr.mxu0 0.0
    %67 = vmatpush1.msra.mxu0 0.0
    %68 = vmatprep.subr.mxu0 0.0
    %69 = vmatpush1.msra.mxu0 0.0
    %70 = vmatprep.subr.mxu0 0.0
    %71 = vmatpush1.msra.mxu0 0.0
    %72 = vmatprep.subr.mxu0 0.0
    %73 = vmatpush1.msra.mxu0 0.0
    %74 = vmatprep.subr.mxu0 0.0
    %75 = vmatpush1.msra.mxu0 %v35
    %76 = vmatprep.subr.mxu0 0.0
    %77 = vmatpush1.msra.mxu0 %v34
    %78 = vmatprep.subr.mxu0 0.0
    %79 = vmatpush2.msra.mxu0 0.0
    %80 = vmatprep.subr.mxu0 0.0
    %81 = vmatpush2.msra.mxu0 0.0
    %82 = vmatprep.subr.mxu0 0.0
    %83 = vmatpush2.msra.mxu0 0.0
    %84 = vmatprep.subr.mxu0 0.0
    %85 = vmatpush2.msra.mxu0 0.0
    %86 = vmatprep.subr.mxu0 0.0
    %87 = vmatpush2.msra.mxu0 0.0
    %88 = vmatprep.subr.mxu0 0.0
    %89 = vmatpush2.msra.mxu0 0.0
    %90 = vmatprep.subr.mxu0 0.0
    %91 = vmatpush2.msra.mxu0 0.0
    %92 = vmatprep.subr.mxu0 0.0
    %93 = vmatpush2.msra.mxu0 0.0
    %94 = vmatprep.subr.mxu0 0.0
    %95 = vmatpush2.msra.mxu0 0.0
    %96 = vmatprep.subr.mxu0 0.0
    %97 = vmatpush2.msra.mxu0 0.0
    %98 = vmatprep.subr.mxu0 0.0
    %99 = vmatpush2.msra.mxu0 0.0
    %100 = vmatprep.subr.mxu0 0.0
    %101 = vmatpush2.msra.mxu0 0.0
    %102 = vmatprep.subr.mxu0 0.0
    %103 = vmatpush2.msra.mxu0 0.0
    %104 = vmatprep.subr.mxu0 0.0
    %105 = vmatpush2.msra.mxu0 0.0
    %106 = vmatprep.subr.mxu0 0.0
    %107 = vmatpush2.msra.mxu0 0.0
    %108 = vmatprep.subr.mxu0 0.0
    %109 = vmatpush2.msra.mxu0 0.0
    %110 = vmatprep.mubr.f32.mxu0 0.0
    %111 = vmatmul.mubr.f32.gmra.mxu0 %v41
    %v112 = vpop.f32.mrf.mxu0
    %v113 = vadd.f32 0.0, %v112
    %v114 = vpop.f32.mrf.mxu0
    %115 = vmatprep.mubr.f32.mxu0 0.0
    %116 = vmatmul.mubr.f32.gmra.mxu0 %v44
    %v117 = vpop.f32.mrf.mxu0
    %v118 = vadd.f32 0.0, %v117
    %v119 = vpop.f32.mrf.mxu0
    %120 = vdwg.mxu0
    %v121 = vld [vmem:[%s2] sm:$0xff]
    %v122 = vld [vmem:[%s2 + $0x8] sm:$0xff]
    %v123 = vld [vmem:[%s2 + $0x10] sm:$0xff]
    %v124 = vld [vmem:[%s2 + $0x18] sm:$0xff]
    %v125 = vld [vmem:[%s2 + $0x20] sm:$0xff]
    %v126 = vld [vmem:[%s2 + $0x28] sm:$0xff]
    %v127 = vld [vmem:[%s2 + $0x30] sm:$0xff]
    %v128 = vld [vmem:[%s2 + $0x38] sm:$0xff]
    %v129 = vld [vmem:[%s2 + $0x40] sm:$0xff]
    %v130 = vld [vmem:[%s2 + $0x48] sm:$0xff]
    %v131 = vld [vmem:[%s2 + $0x50] sm:$0xff]
    %v132 = vld [vmem:[%s2 + $0x58] sm:$0xff]
    %v133 = vld [vmem:[%s2 + $0x60] sm:$0xff]
    %v134 = vld [vmem:[%s2 + $0x68] sm:$0xff]
    %v135 = vld [vmem:[%s2 + $0x70] sm:$0xff]
    %v136 = vld [vmem:[%s2 + $0x78] sm:$0xff]
    %v137 = vlaneseq
    %v138 = vshrl.u32 %v137, 7
    %v139 = vsub.s32 0, %v138
    %v140 = vrot.slane %v38, %v139
    %141 = vmatprep.subr.mxu0 0.0
    %142 = vmatpush1.msra.mxu0 %v136
    %143 = vmatprep.subr.mxu0 0.0
    %144 = vmatpush1.msra.mxu0 %v135
    %145 = vmatprep.subr.mxu0 0.0
    %146 = vmatpush1.msra.mxu0 %v134
    %147 = vmatprep.subr.mxu0 0.0
    %148 = vmatpush1.msra.mxu0 %v133
    %149 = vmatprep.subr.mxu0 0.0
    %150 = vmatpush1.msra.mxu0 %v132
    %151 = vmatprep.subr.mxu0 0.0
    %152 = vmatpush1.msra.mxu0 %v131
    %153 = vmatprep.subr.mxu0 0.0
    %154 = vmatpush1.msra.mxu0 %v130
    %155 = vmatprep.subr.mxu0 0.0
    %156 = vmatpush1.msra.mxu0 %v129
    %157 = vmatprep.subr.mxu0 0.0
    %158 = vmatpush1.msra.mxu0 %v128
    %159 = vmatprep.subr.mxu0 0.0
    %160 = vmatpush1.msra.mxu0 %v127
    %161 = vmatprep.subr.mxu0 0.0
    %162 = vmatpush1.msra.mxu0 %v126
    %163 = vmatprep.subr.mxu0 0.0
    %164 = vmatpush1.msra.mxu0 %v125
    %165 = vmatprep.subr.mxu0 0.0
    %166 = vmatpush1.msra.mxu0 %v124
    %167 = vmatprep.subr.mxu0 0.0
    %168 = vmatpush1.msra.mxu0 %v123
    %169 = vmatprep.subr.mxu0 0.0
    %170 = vmatpush1.msra.mxu0 %v122
    %171 = vmatprep.subr.mxu0 0.0
    %172 = vmatpush1.msra.mxu0 %v121
    %173 = vmatprep.subr.mxu0 0.0
    %174 = vmatpush2.msra.mxu0 0.0
    %175 = vmatprep.subr.mxu0 0.0
    %176 = vmatpush2.msra.mxu0 0.0
    %177 = vmatprep.subr.mxu0 0.0
    %178 = vmatpush2.msra.mxu0 0.0
    %179 = vmatprep.subr.mxu0 0.0
    %180 = vmatpush2.msra.mxu0 0.0
    %181 = vmatprep.subr.mxu0 0.0
    %182 = vmatpush2.msra.mxu0 0.0
    %183 = vmatprep.subr.mxu0 0.0
    %184 = vmatpush2.msra.mxu0 0.0
    %185 = vmatprep.subr.mxu0 0.0
    %186 = vmatpush2.msra.mxu0 0.0
    %187 = vmatprep.subr.mxu0 0.0
    %188 = vmatpush2.msra.mxu0 0.0
    %189 = vmatprep.subr.mxu0 0.0
    %190 = vmatpush2.msra.mxu0 0.0
    %191 = vmatprep.subr.mxu0 0.0
    %192 = vmatpush2.msra.mxu0 0.0
    %193 = vmatprep.subr.mxu0 0.0
    %194 = vmatpush2.msra.mxu0 0.0
    %195 = vmatprep.subr.mxu0 0.0
    %196 = vmatpush2.msra.mxu0 0.0
    %197 = vmatprep.subr.mxu0 0.0
    %198 = vmatpush2.msra.mxu0 0.0
    %199 = vmatprep.subr.mxu0 0.0
    %200 = vmatpush2.msra.mxu0 0.0
    %201 = vmatprep.subr.mxu0 0.0
    %202 = vmatpush2.msra.mxu0 0.0
    %203 = vmatprep.subr.mxu0 0.0
    %204 = vmatpush2.msra.mxu0 0.0
    %205 = vmatprep.mubr.f32.mxu0 0.0
    %206 = vmatmul.mubr.f32.gmra.mxu0 %v113
    %v207 = vpop.f32.mrf.mxu0
    %v208 = vadd.f32 %v140, %v207
    %v209 = vpop.f32.mrf.mxu0
    %210 = vmatprep.mubr.f32.mxu0 0.0
    %211 = vmatmul.mubr.f32.gmra.mxu0 %v118
    %v212 = vpop.f32.mrf.mxu0
    %v213 = vadd.f32 %v140, %v212
    %v214 = vpop.f32.mrf.mxu0
    %215 = vdwg.mxu0
    %v216 = vmax.f32 %v208, 0.0
    %v217 = vmax.f32 %v213, 0.0
    %v218 = vld [vmem:[%s3] sm:$0xff]
    %v219 = vld [vmem:[%s3 + $0x8] sm:$0xff]
    %v220 = vld [vmem:[%s3 + $0x10] sm:$0xff]
    %v221 = vld [vmem:[%s3 + $0x18] sm:$0xff]
    %v222 = vld [vmem:[%s3 + $0x20] sm:$0xff]
    %v223 = vld [vmem:[%s3 + $0x28] sm:$0xff]
    %v224 = vld [vmem:[%s3 + $0x30] sm:$0xff]
    %v225 = vld [vmem:[%s3 + $0x38] sm:$0xff]
    %v226 = vld [vmem:[%s3 + $0x40] sm:$0xff]
    %v227 = vld [vmem:[%s3 + $0x48] sm:$0xff]
    %v228 = vld [vmem:[%s3 + $0x50] sm:$0xff]
    %v229 = vld [vmem:[%s3 + $0x58] sm:$0xff]
    %v230 = vld [vmem:[%s3 + $0x60] sm:$0xff]
    %v231 = vld [vmem:[%s3 + $0x68] sm:$0xff]
    %v232 = vld [vmem:[%s3 + $0x70] sm:$0xff]
    %v233 = vld [vmem:[%s3 + $0x78] sm:$0xff]
    %v234 = vlaneseq
    %v235 = vshrl.u32 %v234, 7
    %v236 = vsub.s32 1, %v235
    %v237 = vrot.slane %v38, %v236
    %238 = vmatprep.subr.mxu0 0.0
    %239 = vmatpush1.msra.mxu0 %v233
    %240 = vmatprep.subr.mxu0 0.0
    %241 = vmatpush1.msra.mxu0 %v232
    %242 = vmatprep.subr.mxu0 0.0
    %243 = vmatpush1.msra.mxu0 %v231
    %244 = vmatprep.subr.mxu0 0.0
    %245 = vmatpush1.msra.mxu0 %v230
    %246 = vmatprep.subr.mxu0 0.0
    %247 = vmatpush1.msra.mxu0 %v229
    %248 = vmatprep.subr.mxu0 0.0
    %249 = vmatpush1.msra.mxu0 %v228
    %250 = vmatprep.subr.mxu0 0.0
    %251 = vmatpush1.msra.mxu0 %v227
    %252 = vmatprep.subr.mxu0 0.0
    %253 = vmatpush1.msra.mxu0 %v226
    %254 = vmatprep.subr.mxu0 0.0
    %255 = vmatpush1.msra.mxu0 %v225
    %256 = vmatprep.subr.mxu0 0.0
    %257 = vmatpush1.msra.mxu0 %v224
    %258 = vmatprep.subr.mxu0 0.0
    %259 = vmatpush1.msra.mxu0 %v223
    %260 = vmatprep.subr.mxu0 0.0
    %261 = vmatpush1.msra.mxu0 %v222
    %262 = vmatprep.subr.mxu0 0.0
    %263 = vmatpush1.msra.mxu0 %v221
    %264 = vmatprep.subr.mxu0 0.0
    %265 = vmatpush1.msra.mxu0 %v220
    %266 = vmatprep.subr.mxu0 0.0
    %267 = vmatpush1.msra.mxu0 %v219
    %268 = vmatprep.subr.mxu0 0.0
    %269 = vmatpush1.msra.mxu0 %v218
    %270 = vmatprep.subr.mxu0 0.0
    %271 = vmatpush2.msra.mxu0 0.0
    %272 = vmatprep.subr.mxu0 0.0
    %273 = vmatpush2.msra.mxu0 0.0
    %274 = vmatprep.subr.mxu0 0.0
    %275 = vmatpush2.msra.mxu0 0.0
    %276 = vmatprep.subr.mxu0 0.0
    %277 = vmatpush2.msra.mxu0 0.0
    %278 = vmatprep.subr.mxu0 0.0
    %279 = vmatpush2.msra.mxu0 0.0
    %280 = vmatprep.subr.mxu0 0.0
    %281 = vmatpush2.msra.mxu0 0.0
    %282 = vmatprep.subr.mxu0 0.0
    %283 = vmatpush2.msra.mxu0 0.0
    %284 = vmatprep.subr.mxu0 0.0
    %285 = vmatpush2.msra.mxu0 0.0
    %286 = vmatprep.subr.mxu0 0.0
    %287 = vmatpush2.msra.mxu0 0.0
    %288 = vmatprep.subr.mxu0 0.0
    %289 = vmatpush2.msra.mxu0 0.0
    %290 = vmatprep.subr.mxu0 0.0
    %291 = vmatpush2.msra.mxu0 0.0
    %292 = vmatprep.subr.mxu0 0.0
    %293 = vmatpush2.msra.mxu0 0.0
    %294 = vmatprep.subr.mxu0 0.0
    %295 = vmatpush2.msra.mxu0 0.0
    %296 = vmatprep.subr.mxu0 0.0
    %297 = vmatpush2.msra.mxu0 0.0
    %298 = vmatprep.subr.mxu0 0.0
    %299 = vmatpush2.msra.mxu0 0.0
    %300 = vmatprep.subr.mxu0 0.0
    %301 = vmatpush2.msra.mxu0 0.0
    %302 = vmatprep.mubr.f32.mxu0 0.0
    %303 = vmatmul.mubr.f32.gmra.mxu0 %v216
    %v304 = vpop.f32.mrf.mxu0
    %v305 = vadd.f32 %v237, %v304
    %v306 = vpop.f32.mrf.mxu0
    %307 = vmatprep.mubr.f32.mxu0 0.0
    %308 = vmatmul.mubr.f32.gmra.mxu0 %v217
    %v309 = vpop.f32.mrf.mxu0
    %v310 = vadd.f32 %v237, %v309
    %v311 = vpop.f32.mrf.mxu0
    %312 = vdwg.mxu0
    %v313 = vmax.f32 %v305, 0.0
    %v314 = vmax.f32 %v310, 0.0
    %v315 = vlaneseq
    %v316 = vshrl.u32 %v315, 7
    %v317 = vsub.s32 2, %v316
    %v318 = vrot.slane %v38, %v317
    %v319 = vmul.f32 %v313, %v318
    %v320 = vmul.f32 %v314, %v318
    %v321 = vlaneseq
    %v322 = vshrl.u32 %v321, 7
    %v323 = vsub.s32 3, %v322
    %v324 = vrot.slane %v38, %v323
    %v325 = vadd.f32 %v319, %v324
    %v326 = vadd.f32 %v320, %v324
    %s327 = scalar_lea.vmem %s4, 8
    %v328 = vld [vmem:[%s327] sm:$0xff]
    %329 = vmatprep.subr.mxu0 0.0
    %330 = vmatpush1.msra.mxu0 0.0
    %331 = vmatprep.subr.mxu0 0.0
    %332 = vmatpush1.msra.mxu0 0.0
    %333 = vmatprep.subr.mxu0 0.0
    %334 = vmatpush1.msra.mxu0 0.0
    %335 = vmatprep.subr.mxu0 0.0
    %336 = vmatpush1.msra.mxu0 0.0
    %337 = vmatprep.subr.mxu0 0.0
    %338 = vmatpush1.msra.mxu0 0.0
    %339 = vmatprep.subr.mxu0 0.0
    %340 = vmatpush1.msra.mxu0 0.0
    %341 = vmatprep.subr.mxu0 0.0
    %342 = vmatpush1.msra.mxu0 0.0
    %343 = vmatprep.subr.mxu0 0.0
    %344 = vmatpush1.msra.mxu0 0.0
    %345 = vmatprep.subr.mxu0 0.0
    %346 = vmatpush1.msra.mxu0 0.0
    %347 = vmatprep.subr.mxu0 0.0
    %348 = vmatpush1.msra.mxu0 0.0
    %349 = vmatprep.subr.mxu0 0.0
    %350 = vmatpush1.msra.mxu0 0.0
    %351 = vmatprep.subr.mxu0 0.0
    %352 = vmatpush1.msra.mxu0 0.0
    %353 = vmatprep.subr.mxu0 0.0
    %354 = vmatpush1.msra.mxu0 0.0
    %355 = vmatprep.subr.mxu0 0.0
    %356 = vmatpush1.msra.mxu0 0.0
    %357 = vmatprep.subr.mxu0 0.0
    %358 = vmatpush1.msra.mxu0 %v326
    %359 = vmatprep.subr.mxu0 0.0
    %360 = vmatpush1.msra.mxu0 %v325
    %361 = vmatprep.subr.mxu0 0.0
    %362 = vmatpush2.msra.mxu0 0.0
    %363 = vmatprep.subr.mxu0 0.0
    %364 = vmatpush2.msra.mxu0 0.0
    %365 = vmatprep.subr.mxu0 0.0
    %366 = vmatpush2.msra.mxu0 0.0
    %367 = vmatprep.subr.mxu0 0.0
    %368 = vmatpush2.msra.mxu0 0.0
    %369 = vmatprep.subr.mxu0 0.0
    %370 = vmatpush2.msra.mxu0 0.0
    %371 = vmatprep.subr.mxu0 0.0
    %372 = vmatpush2.msra.mxu0 0.0
    %373 = vmatprep.subr.mxu0 0.0
    %374 = vmatpush2.msra.mxu0 0.0
    %375 = vmatprep.subr.mxu0 0.0
    %376 = vmatpush2.msra.mxu0 0.0
    %377 = vmatprep.subr.mxu0 0.0
    %378 = vmatpush2.msra.mxu0 0.0
    %379 = vmatprep.subr.mxu0 0.0
    %380 = vmatpush2.msra.mxu0 0.0
    %381 = vmatprep.subr.mxu0 0.0
    %382 = vmatpush2.msra.mxu0 0.0
    %383 = vmatprep.subr.mxu0 0.0
    %384 = vmatpush2.msra.mxu0 0.0
    %385 = vmatprep.subr.mxu0 0.0
    %386 = vmatpush2.msra.mxu0 0.0
    %387 = vmatprep.subr.mxu0 0.0
    %388 = vmatpush2.msra.mxu0 0.0
    %389 = vmatprep.subr.mxu0 0.0
    %390 = vmatpush2.msra.mxu0 0.0
    %391 = vmatprep.subr.mxu0 0.0
    %392 = vmatpush2.msra.mxu0 0.0
    %393 = vmatprep.mubr.f32.mxu0 0.0
    %394 = vmatmul.mubr.f32.gmra.mxu0 %v41
    %v395 = vpop.f32.mrf.mxu0
    %v396 = vadd.f32 0.0, %v395
    %v397 = vpop.f32.mrf.mxu0
    %398 = vmatprep.mubr.f32.mxu0 0.0
    %399 = vmatmul.mubr.f32.gmra.mxu0 %v44
    %v400 = vpop.f32.mrf.mxu0
    %v401 = vadd.f32 0.0, %v400
    %v402 = vpop.f32.mrf.mxu0
    %403 = vdwg.mxu0
    %s404 = scalar_lea.vmem %s2, 128
    %v405 = vld [vmem:[%s404] sm:$0xff]
    %v406 = vld [vmem:[%s404 + $0x8] sm:$0xff]
    %v407 = vld [vmem:[%s404 + $0x10] sm:$0xff]
    %v408 = vld [vmem:[%s404 + $0x18] sm:$0xff]
    %v409 = vld [vmem:[%s404 + $0x20] sm:$0xff]
    %v410 = vld [vmem:[%s404 + $0x28] sm:$0xff]
    %v411 = vld [vmem:[%s404 + $0x30] sm:$0xff]
    %v412 = vld [vmem:[%s404 + $0x38] sm:$0xff]
    %v413 = vld [vmem:[%s404 + $0x40] sm:$0xff]
    %v414 = vld [vmem:[%s404 + $0x48] sm:$0xff]
    %v415 = vld [vmem:[%s404 + $0x50] sm:$0xff]
    %v416 = vld [vmem:[%s404 + $0x58] sm:$0xff]
    %v417 = vld [vmem:[%s404 + $0x60] sm:$0xff]
    %v418 = vld [vmem:[%s404 + $0x68] sm:$0xff]
    %v419 = vld [vmem:[%s404 + $0x70] sm:$0xff]
    %v420 = vld [vmem:[%s404 + $0x78] sm:$0xff]
    %v421 = vlaneseq
    %v422 = vshrl.u32 %v421, 7
    %v423 = vsub.s32 0, %v422
    %v424 = vrot.slane %v328, %v423
    %425 = vmatprep.subr.mxu0 0.0
    %426 = vmatpush1.msra.mxu0 %v420
    %427 = vmatprep.subr.mxu0 0.0
    %428 = vmatpush1.msra.mxu0 %v419
    %429 = vmatprep.subr.mxu0 0.0
    %430 = vmatpush1.msra.mxu0 %v418
    %431 = vmatprep.subr.mxu0 0.0
    %432 = vmatpush1.msra.mxu0 %v417
    %433 = vmatprep.subr.mxu0 0.0
    %434 = vmatpush1.msra.mxu0 %v416
    %435 = vmatprep.subr.mxu0 0.0
    %436 = vmatpush1.msra.mxu0 %v415
    %437 = vmatprep.subr.mxu0 0.0
    %438 = vmatpush1.msra.mxu0 %v414
    %439 = vmatprep.subr.mxu0 0.0
    %440 = vmatpush1.msra.mxu0 %v413
    %441 = vmatprep.subr.mxu0 0.0
    %442 = vmatpush1.msra.mxu0 %v412
    %443 = vmatprep.subr.mxu0 0.0
    %444 = vmatpush1.msra.mxu0 %v411
    %445 = vmatprep.subr.mxu0 0.0
    %446 = vmatpush1.msra.mxu0 %v410
    %447 = vmatprep.subr.mxu0 0.0
    %448 = vmatpush1.msra.mxu0 %v409
    %449 = vmatprep.subr.mxu0 0.0
    %450 = vmatpush1.msra.mxu0 %v408
    %451 = vmatprep.subr.mxu0 0.0
    %452 = vmatpush1.msra.mxu0 %v407
    %453 = vmatprep.subr.mxu0 0.0
    %454 = vmatpush1.msra.mxu0 %v406
    %455 = vmatprep.subr.mxu0 0.0
    %456 = vmatpush1.msra.mxu0 %v405
    %457 = vmatprep.subr.mxu0 0.0
    %458 = vmatpush2.msra.mxu0 0.0
    %459 = vmatprep.subr.mxu0 0.0
    %460 = vmatpush2.msra.mxu0 0.0
    %461 = vmatprep.subr.mxu0 0.0
    %462 = vmatpush2.msra.mxu0 0.0
    %463 = vmatprep.subr.mxu0 0.0
    %464 = vmatpush2.msra.mxu0 0.0
    %465 = vmatprep.subr.mxu0 0.0
    %466 = vmatpush2.msra.mxu0 0.0
    %467 = vmatprep.subr.mxu0 0.0
    %468 = vmatpush2.msra.mxu0 0.0
    %469 = vmatprep.subr.mxu0 0.0
    %470 = vmatpush2.msra.mxu0 0.0
    %471 = vmatprep.subr.mxu0 0.0
    %472 = vmatpush2.msra.mxu0 0.0
    %473 = vmatprep.subr.mxu0 0.0
    %474 = vmatpush2.msra.mxu0 0.0
    %475 = vmatprep.subr.mxu0 0.0
    %476 = vmatpush2.msra.mxu0 0.0
    %477 = vmatprep.subr.mxu0 0.0
    %478 = vmatpush2.msra.mxu0 0.0
    %479 = vmatprep.subr.mxu0 0.0
    %480 = vmatpush2.msra.mxu0 0.0
    %481 = vmatprep.subr.mxu0 0.0
    %482 = vmatpush2.msra.mxu0 0.0
    %483 = vmatprep.subr.mxu0 0.0
    %484 = vmatpush2.msra.mxu0 0.0
    %485 = vmatprep.subr.mxu0 0.0
    %486 = vmatpush2.msra.mxu0 0.0
    %487 = vmatprep.subr.mxu0 0.0
    %488 = vmatpush2.msra.mxu0 0.0
    %489 = vmatprep.mubr.f32.mxu0 0.0
    %490 = vmatmul.mubr.f32.gmra.mxu0 %v396
    %v491 = vpop.f32.mrf.mxu0
    %v492 = vadd.f32 %v424, %v491
    %v493 = vpop.f32.mrf.mxu0
    %494 = vmatprep.mubr.f32.mxu0 0.0
    %495 = vmatmul.mubr.f32.gmra.mxu0 %v401
    %v496 = vpop.f32.mrf.mxu0
    %v497 = vadd.f32 %v424, %v496
    %v498 = vpop.f32.mrf.mxu0
    %499 = vdwg.mxu0
    %v500 = vmax.f32 %v492, 0.0
    %v501 = vmax.f32 %v497, 0.0
    %s502 = scalar_lea.vmem %s3, 128
    %v503 = vld [vmem:[%s502] sm:$0xff]
    %v504 = vld [vmem:[%s502 + $0x8] sm:$0xff]
    %v505 = vld [vmem:[%s502 + $0x10] sm:$0xff]
    %v506 = vld [vmem:[%s502 + $0x18] sm:$0xff]
    %v507 = vld [vmem:[%s502 + $0x20] sm:$0xff]
    %v508 = vld [vmem:[%s502 + $0x28] sm:$0xff]
    %v509 = vld [vmem:[%s502 + $0x30] sm:$0xff]
    %v510 = vld [vmem:[%s502 + $0x38] sm:$0xff]
    %v511 = vld [vmem:[%s502 + $0x40] sm:$0xff]
    %v512 = vld [vmem:[%s502 + $0x48] sm:$0xff]
    %v513 = vld [vmem:[%s502 + $0x50] sm:$0xff]
    %v514 = vld [vmem:[%s502 + $0x58] sm:$0xff]
    %v515 = vld [vmem:[%s502 + $0x60] sm:$0xff]
    %v516 = vld [vmem:[%s502 + $0x68] sm:$0xff]
    %v517 = vld [vmem:[%s502 + $0x70] sm:$0xff]
    %v518 = vld [vmem:[%s502 + $0x78] sm:$0xff]
    %v519 = vlaneseq
    %v520 = vshrl.u32 %v519, 7
    %v521 = vsub.s32 1, %v520
    %v522 = vrot.slane %v328, %v521
    %523 = vmatprep.subr.mxu0 0.0
    %524 = vmatpush1.msra.mxu0 %v518
    %525 = vmatprep.subr.mxu0 0.0
    %526 = vmatpush1.msra.mxu0 %v517
    %527 = vmatprep.subr.mxu0 0.0
    %528 = vmatpush1.msra.mxu0 %v516
    %529 = vmatprep.subr.mxu0 0.0
    %530 = vmatpush1.msra.mxu0 %v515
    %531 = vmatprep.subr.mxu0 0.0
    %532 = vmatpush1.msra.mxu0 %v514
    %533 = vmatprep.subr.mxu0 0.0
    %534 = vmatpush1.msra.mxu0 %v513
    %535 = vmatprep.subr.mxu0 0.0
    %536 = vmatpush1.msra.mxu0 %v512
    %537 = vmatprep.subr.mxu0 0.0
    %538 = vmatpush1.msra.mxu0 %v511
    %539 = vmatprep.subr.mxu0 0.0
    %540 = vmatpush1.msra.mxu0 %v510
    %541 = vmatprep.subr.mxu0 0.0
    %542 = vmatpush1.msra.mxu0 %v509
    %543 = vmatprep.subr.mxu0 0.0
    %544 = vmatpush1.msra.mxu0 %v508
    %545 = vmatprep.subr.mxu0 0.0
    %546 = vmatpush1.msra.mxu0 %v507
    %547 = vmatprep.subr.mxu0 0.0
    %548 = vmatpush1.msra.mxu0 %v506
    %549 = vmatprep.subr.mxu0 0.0
    %550 = vmatpush1.msra.mxu0 %v505
    %551 = vmatprep.subr.mxu0 0.0
    %552 = vmatpush1.msra.mxu0 %v504
    %553 = vmatprep.subr.mxu0 0.0
    %554 = vmatpush1.msra.mxu0 %v503
    %555 = vmatprep.subr.mxu0 0.0
    %556 = vmatpush2.msra.mxu0 0.0
    %557 = vmatprep.subr.mxu0 0.0
    %558 = vmatpush2.msra.mxu0 0.0
    %559 = vmatprep.subr.mxu0 0.0
    %560 = vmatpush2.msra.mxu0 0.0
    %561 = vmatprep.subr.mxu0 0.0
    %562 = vmatpush2.msra.mxu0 0.0
    %563 = vmatprep.subr.mxu0 0.0
    %564 = vmatpush2.msra.mxu0 0.0
    %565 = vmatprep.subr.mxu0 0.0
    %566 = vmatpush2.msra.mxu0 0.0
    %567 = vmatprep.subr.mxu0 0.0
    %568 = vmatpush2.msra.mxu0 0.0
    %569 = vmatprep.subr.mxu0 0.0
    %570 = vmatpush2.msra.mxu0 0.0
    %571 = vmatprep.subr.mxu0 0.0
    %572 = vmatpush2.msra.mxu0 0.0
    %573 = vmatprep.subr.mxu0 0.0
    %574 = vmatpush2.msra.mxu0 0.0
    %575 = vmatprep.subr.mxu0 0.0
    %576 = vmatpush2.msra.mxu0 0.0
    %577 = vmatprep.subr.mxu0 0.0
    %578 = vmatpush2.msra.mxu0 0.0
    %579 = vmatprep.subr.mxu0 0.0
    %580 = vmatpush2.msra.mxu0 0.0
    %581 = vmatprep.subr.mxu0 0.0
    %582 = vmatpush2.msra.mxu0 0.0
    %583 = vmatprep.subr.mxu0 0.0
    %584 = vmatpush2.msra.mxu0 0.0
    %585 = vmatprep.subr.mxu0 0.0
    %586 = vmatpush2.msra.mxu0 0.0
    %587 = vmatprep.mubr.f32.mxu0 0.0
    %588 = vmatmul.mubr.f32.gmra.mxu0 %v500
    %v589 = vpop.f32.mrf.mxu0
    %v590 = vadd.f32 %v522, %v589
    %v591 = vpop.f32.mrf.mxu0
    %592 = vmatprep.mubr.f32.mxu0 0.0
    %593 = vmatmul.mubr.f32.gmra.mxu0 %v501
    %v594 = vpop.f32.mrf.mxu0
    %v595 = vadd.f32 %v522, %v594
    %v596 = vpop.f32.mrf.mxu0
    %597 = vdwg.mxu0
    %v598 = vmax.f32 %v590, 0.0
    %v599 = vmax.f32 %v595, 0.0
    %v600 = vlaneseq
    %v601 = vshrl.u32 %v600, 7
    %v602 = vsub.s32 2, %v601
    %v603 = vrot.slane %v328, %v602
    %v604 = vmul.f32 %v598, %v603
    %v605 = vmul.f32 %v599, %v603
    %v606 = vlaneseq
    %v607 = vshrl.u32 %v606, 7
    %v608 = vsub.s32 3, %v607
    %v609 = vrot.slane %v328, %v608
    %v610 = vadd.f32 %v604, %v609
    %v611 = vadd.f32 %v605, %v609
    %s612 = scalar_lea.vmem %s4, 16
    %v613 = vld [vmem:[%s612] sm:$0xff]
    %614 = vmatprep.subr.mxu0 0.0
    %615 = vmatpush1.msra.mxu0 0.0
    %616 = vmatprep.subr.mxu0 0.0
    %617 = vmatpush1.msra.mxu0 0.0
    %618 = vmatprep.subr.mxu0 0.0
    %619 = vmatpush1.msra.mxu0 0.0
    %620 = vmatprep.subr.mxu0 0.0
    %621 = vmatpush1.msra.mxu0 0.0
    %622 = vmatprep.subr.mxu0 0.0
    %623 = vmatpush1.msra.mxu0 0.0
    %624 = vmatprep.subr.mxu0 0.0
    %625 = vmatpush1.msra.mxu0 0.0
    %626 = vmatprep.subr.mxu0 0.0
    %627 = vmatpush1.msra.mxu0 0.0
    %628 = vmatprep.subr.mxu0 0.0
    %629 = vmatpush1.msra.mxu0 0.0
    %630 = vmatprep.subr.mxu0 0.0
    %631 = vmatpush1.msra.mxu0 0.0
    %632 = vmatprep.subr.mxu0 0.0
    %633 = vmatpush1.msra.mxu0 0.0
    %634 = vmatprep.subr.mxu0 0.0
    %635 = vmatpush1.msra.mxu0 0.0
    %636 = vmatprep.subr.mxu0 0.0
    %637 = vmatpush1.msra.mxu0 0.0
    %638 = vmatprep.subr.mxu0 0.0
    %639 = vmatpush1.msra.mxu0 0.0
    %640 = vmatprep.subr.mxu0 0.0
    %641 = vmatpush1.msra.mxu0 0.0
    %642 = vmatprep.subr.mxu0 0.0
    %643 = vmatpush1.msra.mxu0 %v611
    %644 = vmatprep.subr.mxu0 0.0
    %645 = vmatpush1.msra.mxu0 %v610
    %646 = vmatprep.subr.mxu0 0.0
    %647 = vmatpush2.msra.mxu0 0.0
    %648 = vmatprep.subr.mxu0 0.0
    %649 = vmatpush2.msra.mxu0 0.0
    %650 = vmatprep.subr.mxu0 0.0
    %651 = vmatpush2.msra.mxu0 0.0
    %652 = vmatprep.subr.mxu0 0.0
    %653 = vmatpush2.msra.mxu0 0.0
    %654 = vmatprep.subr.mxu0 0.0
    %655 = vmatpush2.msra.mxu0 0.0
    %656 = vmatprep.subr.mxu0 0.0
    %657 = vmatpush2.msra.mxu0 0.0
    %658 = vmatprep.subr.mxu0 0.0
    %659 = vmatpush2.msra.mxu0 0.0
    %660 = vmatprep.subr.mxu0 0.0
    %661 = vmatpush2.msra.mxu0 0.0
    %662 = vmatprep.subr.mxu0 0.0
    %663 = vmatpush2.msra.mxu0 0.0
    %664 = vmatprep.subr.mxu0 0.0
    %665 = vmatpush2.msra.mxu0 0.0
    %666 = vmatprep.subr.mxu0 0.0
    %667 = vmatpush2.msra.mxu0 0.0
    %668 = vmatprep.subr.mxu0 0.0
    %669 = vmatpush2.msra.mxu0 0.0
    %670 = vmatprep.subr.mxu0 0.0
    %671 = vmatpush2.msra.mxu0 0.0
    %672 = vmatprep.subr.mxu0 0.0
    %673 = vmatpush2.msra.mxu0 0.0
    %674 = vmatprep.subr.mxu0 0.0
    %675 = vmatpush2.msra.mxu0 0.0
    %676 = vmatprep.subr.mxu0 0.0
    %677 = vmatpush2.msra.mxu0 0.0
    %678 = vmatprep.mubr.f32.mxu0 0.0
    %679 = vmatmul.mubr.f32.gmra.mxu0 %v41
    %v680 = vpop.f32.mrf.mxu0
    %v681 = vadd.f32 0.0, %v680
    %v682 = vpop.f32.mrf.mxu0
    %683 = vmatprep.mubr.f32.mxu0 0.0
    %684 = vmatmul.mubr.f32.gmra.mxu0 %v44
    %v685 = vpop.f32.mrf.mxu0
    %v686 = vadd.f32 0.0, %v685
    %v687 = vpop.f32.mrf.mxu0
    %688 = vdwg.mxu0
    %s689 = scalar_lea.vmem %s2, 256
    %v690 = vld [vmem:[%s689] sm:$0xff]
    %v691 = vld [vmem:[%s689 + $0x8] sm:$0xff]
    %v692 = vld [vmem:[%s689 + $0x10] sm:$0xff]
    %v693 = vld [vmem:[%s689 + $0x18] sm:$0xff]
    %v694 = vld [vmem:[%s689 + $0x20] sm:$0xff]
    %v695 = vld [vmem:[%s689 + $0x28] sm:$0xff]
    %v696 = vld [vmem:[%s689 + $0x30] sm:$0xff]
    %v697 = vld [vmem:[%s689 + $0x38] sm:$0xff]
    %v698 = vld [vmem:[%s689 + $0x40] sm:$0xff]
    %v699 = vld [vmem:[%s689 + $0x48] sm:$0xff]
    %v700 = vld [vmem:[%s689 + $0x50] sm:$0xff]
    %v701 = vld [vmem:[%s689 + $0x58] sm:$0xff]
    %v702 = vld [vmem:[%s689 + $0x60] sm:$0xff]
    %v703 = vld [vmem:[%s689 + $0x68] sm:$0xff]
    %v704 = vld [vmem:[%s689 + $0x70] sm:$0xff]
    %v705 = vld [vmem:[%s689 + $0x78] sm:$0xff]
    %v706 = vlaneseq
    %v707 = vshrl.u32 %v706, 7
    %v708 = vsub.s32 0, %v707
    %v709 = vrot.slane %v613, %v708
    %710 = vmatprep.subr.mxu0 0.0
    %711 = vmatpush1.msra.mxu0 %v705
    %712 = vmatprep.subr.mxu0 0.0
    %713 = vmatpush1.msra.mxu0 %v704
    %714 = vmatprep.subr.mxu0 0.0
    %715 = vmatpush1.msra.mxu0 %v703
    %716 = vmatprep.subr.mxu0 0.0
    %717 = vmatpush1.msra.mxu0 %v702
    %718 = vmatprep.subr.mxu0 0.0
    %719 = vmatpush1.msra.mxu0 %v701
    %720 = vmatprep.subr.mxu0 0.0
    %721 = vmatpush1.msra.mxu0 %v700
    %722 = vmatprep.subr.mxu0 0.0
    %723 = vmatpush1.msra.mxu0 %v699
    %724 = vmatprep.subr.mxu0 0.0
    %725 = vmatpush1.msra.mxu0 %v698
    %726 = vmatprep.subr.mxu0 0.0
    %727 = vmatpush1.msra.mxu0 %v697
    %728 = vmatprep.subr.mxu0 0.0
    %729 = vmatpush1.msra.mxu0 %v696
    %730 = vmatprep.subr.mxu0 0.0
    %731 = vmatpush1.msra.mxu0 %v695
    %732 = vmatprep.subr.mxu0 0.0
    %733 = vmatpush1.msra.mxu0 %v694
    %734 = vmatprep.subr.mxu0 0.0
    %735 = vmatpush1.msra.mxu0 %v693
    %736 = vmatprep.subr.mxu0 0.0
    %737 = vmatpush1.msra.mxu0 %v692
    %738 = vmatprep.subr.mxu0 0.0
    %739 = vmatpush1.msra.mxu0 %v691
    %740 = vmatprep.subr.mxu0 0.0
    %741 = vmatpush1.msra.mxu0 %v690
    %742 = vmatprep.subr.mxu0 0.0
    %743 = vmatpush2.msra.mxu0 0.0
    %744 = vmatprep.subr.mxu0 0.0
    %745 = vmatpush2.msra.mxu0 0.0
    %746 = vmatprep.subr.mxu0 0.0
    %747 = vmatpush2.msra.mxu0 0.0
    %748 = vmatprep.subr.mxu0 0.0
    %749 = vmatpush2.msra.mxu0 0.0
    %750 = vmatprep.subr.mxu0 0.0
    %751 = vmatpush2.msra.mxu0 0.0
    %752 = vmatprep.subr.mxu0 0.0
    %753 = vmatpush2.msra.mxu0 0.0
    %754 = vmatprep.subr.mxu0 0.0
    %755 = vmatpush2.msra.mxu0 0.0
    %756 = vmatprep.subr.mxu0 0.0
    %757 = vmatpush2.msra.mxu0 0.0
    %758 = vmatprep.subr.mxu0 0.0
    %759 = vmatpush2.msra.mxu0 0.0
    %760 = vmatprep.subr.mxu0 0.0
    %761 = vmatpush2.msra.mxu0 0.0
    %762 = vmatprep.subr.mxu0 0.0
    %763 = vmatpush2.msra.mxu0 0.0
    %764 = vmatprep.subr.mxu0 0.0
    %765 = vmatpush2.msra.mxu0 0.0
    %766 = vmatprep.subr.mxu0 0.0
    %767 = vmatpush2.msra.mxu0 0.0
    %768 = vmatprep.subr.mxu0 0.0
    %769 = vmatpush2.msra.mxu0 0.0
    %770 = vmatprep.subr.mxu0 0.0
    %771 = vmatpush2.msra.mxu0 0.0
    %772 = vmatprep.subr.mxu0 0.0
    %773 = vmatpush2.msra.mxu0 0.0
    %774 = vmatprep.mubr.f32.mxu0 0.0
    %775 = vmatmul.mubr.f32.gmra.mxu0 %v681
    %v776 = vpop.f32.mrf.mxu0
    %v777 = vadd.f32 %v709, %v776
    %v778 = vpop.f32.mrf.mxu0
    %779 = vmatprep.mubr.f32.mxu0 0.0
    %780 = vmatmul.mubr.f32.gmra.mxu0 %v686
    %v781 = vpop.f32.mrf.mxu0
    %v782 = vadd.f32 %v709, %v781
    %v783 = vpop.f32.mrf.mxu0
    %784 = vdwg.mxu0
    %v785 = vmax.f32 %v777, 0.0
    %v786 = vmax.f32 %v782, 0.0
    %s787 = scalar_lea.vmem %s3, 256
    %v788 = vld [vmem:[%s787] sm:$0xff]
    %v789 = vld [vmem:[%s787 + $0x8] sm:$0xff]
    %v790 = vld [vmem:[%s787 + $0x10] sm:$0xff]
    %v791 = vld [vmem:[%s787 + $0x18] sm:$0xff]
    %v792 = vld [vmem:[%s787 + $0x20] sm:$0xff]
    %v793 = vld [vmem:[%s787 + $0x28] sm:$0xff]
    %v794 = vld [vmem:[%s787 + $0x30] sm:$0xff]
    %v795 = vld [vmem:[%s787 + $0x38] sm:$0xff]
    %v796 = vld [vmem:[%s787 + $0x40] sm:$0xff]
    %v797 = vld [vmem:[%s787 + $0x48] sm:$0xff]
    %v798 = vld [vmem:[%s787 + $0x50] sm:$0xff]
    %v799 = vld [vmem:[%s787 + $0x58] sm:$0xff]
    %v800 = vld [vmem:[%s787 + $0x60] sm:$0xff]
    %v801 = vld [vmem:[%s787 + $0x68] sm:$0xff]
    %v802 = vld [vmem:[%s787 + $0x70] sm:$0xff]
    %v803 = vld [vmem:[%s787 + $0x78] sm:$0xff]
    %v804 = vlaneseq
    %v805 = vshrl.u32 %v804, 7
    %v806 = vsub.s32 1, %v805
    %v807 = vrot.slane %v613, %v806
    %808 = vmatprep.subr.mxu0 0.0
    %809 = vmatpush1.msra.mxu0 %v803
    %810 = vmatprep.subr.mxu0 0.0
    %811 = vmatpush1.msra.mxu0 %v802
    %812 = vmatprep.subr.mxu0 0.0
    %813 = vmatpush1.msra.mxu0 %v801
    %814 = vmatprep.subr.mxu0 0.0
    %815 = vmatpush1.msra.mxu0 %v800
    %816 = vmatprep.subr.mxu0 0.0
    %817 = vmatpush1.msra.mxu0 %v799
    %818 = vmatprep.subr.mxu0 0.0
    %819 = vmatpush1.msra.mxu0 %v798
    %820 = vmatprep.subr.mxu0 0.0
    %821 = vmatpush1.msra.mxu0 %v797
    %822 = vmatprep.subr.mxu0 0.0
    %823 = vmatpush1.msra.mxu0 %v796
    %824 = vmatprep.subr.mxu0 0.0
    %825 = vmatpush1.msra.mxu0 %v795
    %826 = vmatprep.subr.mxu0 0.0
    %827 = vmatpush1.msra.mxu0 %v794
    %828 = vmatprep.subr.mxu0 0.0
    %829 = vmatpush1.msra.mxu0 %v793
    %830 = vmatprep.subr.mxu0 0.0
    %831 = vmatpush1.msra.mxu0 %v792
    %832 = vmatprep.subr.mxu0 0.0
    %833 = vmatpush1.msra.mxu0 %v791
    %834 = vmatprep.subr.mxu0 0.0
    %835 = vmatpush1.msra.mxu0 %v790
    %836 = vmatprep.subr.mxu0 0.0
    %837 = vmatpush1.msra.mxu0 %v789
    %838 = vmatprep.subr.mxu0 0.0
    %839 = vmatpush1.msra.mxu0 %v788
    %840 = vmatprep.subr.mxu0 0.0
    %841 = vmatpush2.msra.mxu0 0.0
    %842 = vmatprep.subr.mxu0 0.0
    %843 = vmatpush2.msra.mxu0 0.0
    %844 = vmatprep.subr.mxu0 0.0
    %845 = vmatpush2.msra.mxu0 0.0
    %846 = vmatprep.subr.mxu0 0.0
    %847 = vmatpush2.msra.mxu0 0.0
    %848 = vmatprep.subr.mxu0 0.0
    %849 = vmatpush2.msra.mxu0 0.0
    %850 = vmatprep.subr.mxu0 0.0
    %851 = vmatpush2.msra.mxu0 0.0
    %852 = vmatprep.subr.mxu0 0.0
    %853 = vmatpush2.msra.mxu0 0.0
    %854 = vmatprep.subr.mxu0 0.0
    %855 = vmatpush2.msra.mxu0 0.0
    %856 = vmatprep.subr.mxu0 0.0
    %857 = vmatpush2.msra.mxu0 0.0
    %858 = vmatprep.subr.mxu0 0.0
    %859 = vmatpush2.msra.mxu0 0.0
    %860 = vmatprep.subr.mxu0 0.0
    %861 = vmatpush2.msra.mxu0 0.0
    %862 = vmatprep.subr.mxu0 0.0
    %863 = vmatpush2.msra.mxu0 0.0
    %864 = vmatprep.subr.mxu0 0.0
    %865 = vmatpush2.msra.mxu0 0.0
    %866 = vmatprep.subr.mxu0 0.0
    %867 = vmatpush2.msra.mxu0 0.0
    %868 = vmatprep.subr.mxu0 0.0
    %869 = vmatpush2.msra.mxu0 0.0
    %870 = vmatprep.subr.mxu0 0.0
    %871 = vmatpush2.msra.mxu0 0.0
    %872 = vmatprep.mubr.f32.mxu0 0.0
    %873 = vmatmul.mubr.f32.gmra.mxu0 %v785
    %v874 = vpop.f32.mrf.mxu0
    %v875 = vadd.f32 %v807, %v874
    %v876 = vpop.f32.mrf.mxu0
    %877 = vmatprep.mubr.f32.mxu0 0.0
    %878 = vmatmul.mubr.f32.gmra.mxu0 %v786
    %v879 = vpop.f32.mrf.mxu0
    %v880 = vadd.f32 %v807, %v879
    %v881 = vpop.f32.mrf.mxu0
    %882 = vdwg.mxu0
    %v883 = vmax.f32 %v875, 0.0
    %v884 = vmax.f32 %v880, 0.0
    %v885 = vlaneseq
    %v886 = vshrl.u32 %v885, 7
    %v887 = vsub.s32 2, %v886
    %v888 = vrot.slane %v613, %v887
    %v889 = vmul.f32 %v883, %v888
    %v890 = vmul.f32 %v884, %v888
    %v891 = vlaneseq
    %v892 = vshrl.u32 %v891, 7
    %v893 = vsub.s32 3, %v892
    %v894 = vrot.slane %v613, %v893
    %v895 = vadd.f32 %v889, %v894
    %v896 = vadd.f32 %v890, %v894
    %s897 = scalar_lea.vmem %s4, 24
    %v898 = vld [vmem:[%s897] sm:$0xff]
    %899 = vmatprep.subr.mxu0 0.0
    %900 = vmatpush1.msra.mxu0 0.0
    %901 = vmatprep.subr.mxu0 0.0
    %902 = vmatpush1.msra.mxu0 0.0
    %903 = vmatprep.subr.mxu0 0.0
    %904 = vmatpush1.msra.mxu0 0.0
    %905 = vmatprep.subr.mxu0 0.0
    %906 = vmatpush1.msra.mxu0 0.0
    %907 = vmatprep.subr.mxu0 0.0
    %908 = vmatpush1.msra.mxu0 0.0
    %909 = vmatprep.subr.mxu0 0.0
    %910 = vmatpush1.msra.mxu0 0.0
    %911 = vmatprep.subr.mxu0 0.0
    %912 = vmatpush1.msra.mxu0 0.0
    %913 = vmatprep.subr.mxu0 0.0
    %914 = vmatpush1.msra.mxu0 0.0
    %915 = vmatprep.subr.mxu0 0.0
    %916 = vmatpush1.msra.mxu0 0.0
    %917 = vmatprep.subr.mxu0 0.0
    %918 = vmatpush1.msra.mxu0 0.0
    %919 = vmatprep.subr.mxu0 0.0
    %920 = vmatpush1.msra.mxu0 0.0
    %921 = vmatprep.subr.mxu0 0.0
    %922 = vmatpush1.msra.mxu0 0.0
    %923 = vmatprep.subr.mxu0 0.0
    %924 = vmatpush1.msra.mxu0 0.0
    %925 = vmatprep.subr.mxu0 0.0
    %926 = vmatpush1.msra.mxu0 0.0
    %927 = vmatprep.subr.mxu0 0.0
    %928 = vmatpush1.msra.mxu0 %v896
    %929 = vmatprep.subr.mxu0 0.0
    %930 = vmatpush1.msra.mxu0 %v895
    %931 = vmatprep.subr.mxu0 0.0
    %932 = vmatpush2.msra.mxu0 0.0
    %933 = vmatprep.subr.mxu0 0.0
    %934 = vmatpush2.msra.mxu0 0.0
    %935 = vmatprep.subr.mxu0 0.0
    %936 = vmatpush2.msra.mxu0 0.0
    %937 = vmatprep.subr.mxu0 0.0
    %938 = vmatpush2.msra.mxu0 0.0
    %939 = vmatprep.subr.mxu0 0.0
    %940 = vmatpush2.msra.mxu0 0.0
    %941 = vmatprep.subr.mxu0 0.0
    %942 = vmatpush2.msra.mxu0 0.0
    %943 = vmatprep.subr.mxu0 0.0
    %944 = vmatpush2.msra.mxu0 0.0
    %945 = vmatprep.subr.mxu0 0.0
    %946 = vmatpush2.msra.mxu0 0.0
    %947 = vmatprep.subr.mxu0 0.0
    %948 = vmatpush2.msra.mxu0 0.0
    %949 = vmatprep.subr.mxu0 0.0
    %950 = vmatpush2.msra.mxu0 0.0
    %951 = vmatprep.subr.mxu0 0.0
    %952 = vmatpush2.msra.mxu0 0.0
    %953 = vmatprep.subr.mxu0 0.0
    %954 = vmatpush2.msra.mxu0 0.0
    %955 = vmatprep.subr.mxu0 0.0
    %956 = vmatpush2.msra.mxu0 0.0
    %957 = vmatprep.subr.mxu0 0.0
    %958 = vmatpush2.msra.mxu0 0.0
    %959 = vmatprep.subr.mxu0 0.0
    %960 = vmatpush2.msra.mxu0 0.0
    %961 = vmatprep.subr.mxu0 0.0
    %962 = vmatpush2.msra.mxu0 0.0
    %963 = vmatprep.mubr.f32.mxu0 0.0
    %964 = vmatmul.mubr.f32.gmra.mxu0 %v41
    %v965 = vpop.f32.mrf.mxu0
    %v966 = vadd.f32 0.0, %v965
    %v967 = vpop.f32.mrf.mxu0
    %968 = vmatprep.mubr.f32.mxu0 0.0
    %969 = vmatmul.mubr.f32.gmra.mxu0 %v44
    %v970 = vpop.f32.mrf.mxu0
    %v971 = vadd.f32 0.0, %v970
    %v972 = vpop.f32.mrf.mxu0
    %973 = vdwg.mxu0
    %s974 = scalar_lea.vmem %s2, 384
    %v975 = vld [vmem:[%s974] sm:$0xff]
    %v976 = vld [vmem:[%s974 + $0x8] sm:$0xff]
    %v977 = vld [vmem:[%s974 + $0x10] sm:$0xff]
    %v978 = vld [vmem:[%s974 + $0x18] sm:$0xff]
    %v979 = vld [vmem:[%s974 + $0x20] sm:$0xff]
    %v980 = vld [vmem:[%s974 + $0x28] sm:$0xff]
    %v981 = vld [vmem:[%s974 + $0x30] sm:$0xff]
    %v982 = vld [vmem:[%s974 + $0x38] sm:$0xff]
    %v983 = vld [vmem:[%s974 + $0x40] sm:$0xff]
    %v984 = vld [vmem:[%s974 + $0x48] sm:$0xff]
    %v985 = vld [vmem:[%s974 + $0x50] sm:$0xff]
    %v986 = vld [vmem:[%s974 + $0x58] sm:$0xff]
    %v987 = vld [vmem:[%s974 + $0x60] sm:$0xff]
    %v988 = vld [vmem:[%s974 + $0x68] sm:$0xff]
    %v989 = vld [vmem:[%s974 + $0x70] sm:$0xff]
    %v990 = vld [vmem:[%s974 + $0x78] sm:$0xff]
    %v991 = vlaneseq
    %v992 = vshrl.u32 %v991, 7
    %v993 = vsub.s32 0, %v992
    %v994 = vrot.slane %v898, %v993
    %995 = vmatprep.subr.mxu0 0.0
    %996 = vmatpush1.msra.mxu0 %v990
    %997 = vmatprep.subr.mxu0 0.0
    %998 = vmatpush1.msra.mxu0 %v989
    %999 = vmatprep.subr.mxu0 0.0
    %1000 = vmatpush1.msra.mxu0 %v988
    %1001 = vmatprep.subr.mxu0 0.0
    %1002 = vmatpush1.msra.mxu0 %v987
    %1003 = vmatprep.subr.mxu0 0.0
    %1004 = vmatpush1.msra.mxu0 %v986
    %1005 = vmatprep.subr.mxu0 0.0
    %1006 = vmatpush1.msra.mxu0 %v985
    %1007 = vmatprep.subr.mxu0 0.0
    %1008 = vmatpush1.msra.mxu0 %v984
    %1009 = vmatprep.subr.mxu0 0.0
    %1010 = vmatpush1.msra.mxu0 %v983
    %1011 = vmatprep.subr.mxu0 0.0
    %1012 = vmatpush1.msra.mxu0 %v982
    %1013 = vmatprep.subr.mxu0 0.0
    %1014 = vmatpush1.msra.mxu0 %v981
    %1015 = vmatprep.subr.mxu0 0.0
    %1016 = vmatpush1.msra.mxu0 %v980
    %1017 = vmatprep.subr.mxu0 0.0
    %1018 = vmatpush1.msra.mxu0 %v979
    %1019 = vmatprep.subr.mxu0 0.0
    %1020 = vmatpush1.msra.mxu0 %v978
    %1021 = vmatprep.subr.mxu0 0.0
    %1022 = vmatpush1.msra.mxu0 %v977
    %1023 = vmatprep.subr.mxu0 0.0
    %1024 = vmatpush1.msra.mxu0 %v976
    %1025 = vmatprep.subr.mxu0 0.0
    %1026 = vmatpush1.msra.mxu0 %v975
    %1027 = vmatprep.subr.mxu0 0.0
    %1028 = vmatpush2.msra.mxu0 0.0
    %1029 = vmatprep.subr.mxu0 0.0
    %1030 = vmatpush2.msra.mxu0 0.0
    %1031 = vmatprep.subr.mxu0 0.0
    %1032 = vmatpush2.msra.mxu0 0.0
    %1033 = vmatprep.subr.mxu0 0.0
    %1034 = vmatpush2.msra.mxu0 0.0
    %1035 = vmatprep.subr.mxu0 0.0
    %1036 = vmatpush2.msra.mxu0 0.0
    %1037 = vmatprep.subr.mxu0 0.0
    %1038 = vmatpush2.msra.mxu0 0.0
    %1039 = vmatprep.subr.mxu0 0.0
    %1040 = vmatpush2.msra.mxu0 0.0
    %1041 = vmatprep.subr.mxu0 0.0
    %1042 = vmatpush2.msra.mxu0 0.0
    %1043 = vmatprep.subr.mxu0 0.0
    %1044 = vmatpush2.msra.mxu0 0.0
    %1045 = vmatprep.subr.mxu0 0.0
    %1046 = vmatpush2.msra.mxu0 0.0
    %1047 = vmatprep.subr.mxu0 0.0
    %1048 = vmatpush2.msra.mxu0 0.0
    %1049 = vmatprep.subr.mxu0 0.0
    %1050 = vmatpush2.msra.mxu0 0.0
    %1051 = vmatprep.subr.mxu0 0.0
    %1052 = vmatpush2.msra.mxu0 0.0
    %1053 = vmatprep.subr.mxu0 0.0
    %1054 = vmatpush2.msra.mxu0 0.0
    %1055 = vmatprep.subr.mxu0 0.0
    %1056 = vmatpush2.msra.mxu0 0.0
    %1057 = vmatprep.subr.mxu0 0.0
    %1058 = vmatpush2.msra.mxu0 0.0
    %1059 = vmatprep.mubr.f32.mxu0 0.0
    %1060 = vmatmul.mubr.f32.gmra.mxu0 %v966
    %v1061 = vpop.f32.mrf.mxu0
    %v1062 = vadd.f32 %v994, %v1061
    %v1063 = vpop.f32.mrf.mxu0
    %1064 = vmatprep.mubr.f32.mxu0 0.0
    %1065 = vmatmul.mubr.f32.gmra.mxu0 %v971
    %v1066 = vpop.f32.mrf.mxu0
    %v1067 = vadd.f32 %v994, %v1066
    %v1068 = vpop.f32.mrf.mxu0
    %1069 = vdwg.mxu0
    %v1070 = vmax.f32 %v1062, 0.0
    %v1071 = vmax.f32 %v1067, 0.0
    %s1072 = scalar_lea.vmem %s3, 384
    %v1073 = vld [vmem:[%s1072] sm:$0xff]
    %v1074 = vld [vmem:[%s1072 + $0x8] sm:$0xff]
    %v1075 = vld [vmem:[%s1072 + $0x10] sm:$0xff]
    %v1076 = vld [vmem:[%s1072 + $0x18] sm:$0xff]
    %v1077 = vld [vmem:[%s1072 + $0x20] sm:$0xff]
    %v1078 = vld [vmem:[%s1072 + $0x28] sm:$0xff]
    %v1079 = vld [vmem:[%s1072 + $0x30] sm:$0xff]
    %v1080 = vld [vmem:[%s1072 + $0x38] sm:$0xff]
    %v1081 = vld [vmem:[%s1072 + $0x40] sm:$0xff]
    %v1082 = vld [vmem:[%s1072 + $0x48] sm:$0xff]
    %v1083 = vld [vmem:[%s1072 + $0x50] sm:$0xff]
    %v1084 = vld [vmem:[%s1072 + $0x58] sm:$0xff]
    %v1085 = vld [vmem:[%s1072 + $0x60] sm:$0xff]
    %v1086 = vld [vmem:[%s1072 + $0x68] sm:$0xff]
    %v1087 = vld [vmem:[%s1072 + $0x70] sm:$0xff]
    %v1088 = vld [vmem:[%s1072 + $0x78] sm:$0xff]
    %v1089 = vlaneseq
    %v1090 = vshrl.u32 %v1089, 7
    %v1091 = vsub.s32 1, %v1090
    %v1092 = vrot.slane %v898, %v1091
    %1093 = vmatprep.subr.mxu0 0.0
    %1094 = vmatpush1.msra.mxu0 %v1088
    %1095 = vmatprep.subr.mxu0 0.0
    %1096 = vmatpush1.msra.mxu0 %v1087
    %1097 = vmatprep.subr.mxu0 0.0
    %1098 = vmatpush1.msra.mxu0 %v1086
    %1099 = vmatprep.subr.mxu0 0.0
    %1100 = vmatpush1.msra.mxu0 %v1085
    %1101 = vmatprep.subr.mxu0 0.0
    %1102 = vmatpush1.msra.mxu0 %v1084
    %1103 = vmatprep.subr.mxu0 0.0
    %1104 = vmatpush1.msra.mxu0 %v1083
    %1105 = vmatprep.subr.mxu0 0.0
    %1106 = vmatpush1.msra.mxu0 %v1082
    %1107 = vmatprep.subr.mxu0 0.0
    %1108 = vmatpush1.msra.mxu0 %v1081
    %1109 = vmatprep.subr.mxu0 0.0
    %1110 = vmatpush1.msra.mxu0 %v1080
    %1111 = vmatprep.subr.mxu0 0.0
    %1112 = vmatpush1.msra.mxu0 %v1079
    %1113 = vmatprep.subr.mxu0 0.0
    %1114 = vmatpush1.msra.mxu0 %v1078
    %1115 = vmatprep.subr.mxu0 0.0
    %1116 = vmatpush1.msra.mxu0 %v1077
    %1117 = vmatprep.subr.mxu0 0.0
    %1118 = vmatpush1.msra.mxu0 %v1076
    %1119 = vmatprep.subr.mxu0 0.0
    %1120 = vmatpush1.msra.mxu0 %v1075
    %1121 = vmatprep.subr.mxu0 0.0
    %1122 = vmatpush1.msra.mxu0 %v1074
    %1123 = vmatprep.subr.mxu0 0.0
    %1124 = vmatpush1.msra.mxu0 %v1073
    %1125 = vmatprep.subr.mxu0 0.0
    %1126 = vmatpush2.msra.mxu0 0.0
    %1127 = vmatprep.subr.mxu0 0.0
    %1128 = vmatpush2.msra.mxu0 0.0
    %1129 = vmatprep.subr.mxu0 0.0
    %1130 = vmatpush2.msra.mxu0 0.0
    %1131 = vmatprep.subr.mxu0 0.0
    %1132 = vmatpush2.msra.mxu0 0.0
    %1133 = vmatprep.subr.mxu0 0.0
    %1134 = vmatpush2.msra.mxu0 0.0
    %1135 = vmatprep.subr.mxu0 0.0
    %1136 = vmatpush2.msra.mxu0 0.0
    %1137 = vmatprep.subr.mxu0 0.0
    %1138 = vmatpush2.msra.mxu0 0.0
    %1139 = vmatprep.subr.mxu0 0.0
    %1140 = vmatpush2.msra.mxu0 0.0
    %1141 = vmatprep.subr.mxu0 0.0
    %1142 = vmatpush2.msra.mxu0 0.0
    %1143 = vmatprep.subr.mxu0 0.0
    %1144 = vmatpush2.msra.mxu0 0.0
    %1145 = vmatprep.subr.mxu0 0.0
    %1146 = vmatpush2.msra.mxu0 0.0
    %1147 = vmatprep.subr.mxu0 0.0
    %1148 = vmatpush2.msra.mxu0 0.0
    %1149 = vmatprep.subr.mxu0 0.0
    %1150 = vmatpush2.msra.mxu0 0.0
    %1151 = vmatprep.subr.mxu0 0.0
    %1152 = vmatpush2.msra.mxu0 0.0
    %1153 = vmatprep.subr.mxu0 0.0
    %1154 = vmatpush2.msra.mxu0 0.0
    %1155 = vmatprep.subr.mxu0 0.0
    %1156 = vmatpush2.msra.mxu0 0.0
    %1157 = vmatprep.mubr.f32.mxu0 0.0
    %1158 = vmatmul.mubr.f32.gmra.mxu0 %v1070
    %v1159 = vpop.f32.mrf.mxu0
    %v1160 = vadd.f32 %v1092, %v1159
    %v1161 = vpop.f32.mrf.mxu0
    %1162 = vmatprep.mubr.f32.mxu0 0.0
    %1163 = vmatmul.mubr.f32.gmra.mxu0 %v1071
    %v1164 = vpop.f32.mrf.mxu0
    %v1165 = vadd.f32 %v1092, %v1164
    %v1166 = vpop.f32.mrf.mxu0
    %1167 = vdwg.mxu0
    %v1168 = vmax.f32 %v1160, 0.0
    %v1169 = vmax.f32 %v1165, 0.0
    %v1170 = vlaneseq
    %v1171 = vshrl.u32 %v1170, 7
    %v1172 = vsub.s32 2, %v1171
    %v1173 = vrot.slane %v898, %v1172
    %v1174 = vmul.f32 %v1168, %v1173
    %v1175 = vmul.f32 %v1169, %v1173
    %v1176 = vlaneseq
    %v1177 = vshrl.u32 %v1176, 7
    %v1178 = vsub.s32 3, %v1177
    %v1179 = vrot.slane %v898, %v1178
    %v1180 = vadd.f32 %v1174, %v1179
    %v1181 = vadd.f32 %v1175, %v1179
    %s1182 = scalar_lea.vmem %s4, 32
    %v1183 = vld [vmem:[%s1182] sm:$0xff]
    %1184 = vmatprep.subr.mxu0 0.0
    %1185 = vmatpush1.msra.mxu0 0.0
    %1186 = vmatprep.subr.mxu0 0.0
    %1187 = vmatpush1.msra.mxu0 0.0
    %1188 = vmatprep.subr.mxu0 0.0
    %1189 = vmatpush1.msra.mxu0 0.0
    %1190 = vmatprep.subr.mxu0 0.0
    %1191 = vmatpush1.msra.mxu0 0.0
    %1192 = vmatprep.subr.mxu0 0.0
    %1193 = vmatpush1.msra.mxu0 0.0
    %1194 = vmatprep.subr.mxu0 0.0
    %1195 = vmatpush1.msra.mxu0 0.0
    %1196 = vmatprep.subr.mxu0 0.0
    %1197 = vmatpush1.msra.mxu0 0.0
    %1198 = vmatprep.subr.mxu0 0.0
    %1199 = vmatpush1.msra.mxu0 0.0
    %1200 = vmatprep.subr.mxu0 0.0
    %1201 = vmatpush1.msra.mxu0 0.0
    %1202 = vmatprep.subr.mxu0 0.0
    %1203 = vmatpush1.msra.mxu0 0.0
    %1204 = vmatprep.subr.mxu0 0.0
    %1205 = vmatpush1.msra.mxu0 0.0
    %1206 = vmatprep.subr.mxu0 0.0
    %1207 = vmatpush1.msra.mxu0 0.0
    %1208 = vmatprep.subr.mxu0 0.0
    %1209 = vmatpush1.msra.mxu0 0.0
    %1210 = vmatprep.subr.mxu0 0.0
    %1211 = vmatpush1.msra.mxu0 0.0
    %1212 = vmatprep.subr.mxu0 0.0
    %1213 = vmatpush1.msra.mxu0 %v1181
    %1214 = vmatprep.subr.mxu0 0.0
    %1215 = vmatpush1.msra.mxu0 %v1180
    %1216 = vmatprep.subr.mxu0 0.0
    %1217 = vmatpush2.msra.mxu0 0.0
    %1218 = vmatprep.subr.mxu0 0.0
    %1219 = vmatpush2.msra.mxu0 0.0
    %1220 = vmatprep.subr.mxu0 0.0
    %1221 = vmatpush2.msra.mxu0 0.0
    %1222 = vmatprep.subr.mxu0 0.0
    %1223 = vmatpush2.msra.mxu0 0.0
    %1224 = vmatprep.subr.mxu0 0.0
    %1225 = vmatpush2.msra.mxu0 0.0
    %1226 = vmatprep.subr.mxu0 0.0
    %1227 = vmatpush2.msra.mxu0 0.0
    %1228 = vmatprep.subr.mxu0 0.0
    %1229 = vmatpush2.msra.mxu0 0.0
    %1230 = vmatprep.subr.mxu0 0.0
    %1231 = vmatpush2.msra.mxu0 0.0
    %1232 = vmatprep.subr.mxu0 0.0
    %1233 = vmatpush2.msra.mxu0 0.0
    %1234 = vmatprep.subr.mxu0 0.0
    %1235 = vmatpush2.msra.mxu0 0.0
    %1236 = vmatprep.subr.mxu0 0.0
    %1237 = vmatpush2.msra.mxu0 0.0
    %1238 = vmatprep.subr.mxu0 0.0
    %1239 = vmatpush2.msra.mxu0 0.0
    %1240 = vmatprep.subr.mxu0 0.0
    %1241 = vmatpush2.msra.mxu0 0.0
    %1242 = vmatprep.subr.mxu0 0.0
    %1243 = vmatpush2.msra.mxu0 0.0
    %1244 = vmatprep.subr.mxu0 0.0
    %1245 = vmatpush2.msra.mxu0 0.0
    %1246 = vmatprep.subr.mxu0 0.0
    %1247 = vmatpush2.msra.mxu0 0.0
    %1248 = vmatprep.mubr.f32.mxu0 0.0
    %1249 = vmatmul.mubr.f32.gmra.mxu0 %v41
    %v1250 = vpop.f32.mrf.mxu0
    %v1251 = vadd.f32 0.0, %v1250
    %v1252 = vpop.f32.mrf.mxu0
    %1253 = vmatprep.mubr.f32.mxu0 0.0
    %1254 = vmatmul.mubr.f32.gmra.mxu0 %v44
    %v1255 = vpop.f32.mrf.mxu0
    %v1256 = vadd.f32 0.0, %v1255
    %v1257 = vpop.f32.mrf.mxu0
    %1258 = vdwg.mxu0
    %s1259 = scalar_lea.vmem %s2, 512
    %v1260 = vld [vmem:[%s1259] sm:$0xff]
    %v1261 = vld [vmem:[%s1259 + $0x8] sm:$0xff]
    %v1262 = vld [vmem:[%s1259 + $0x10] sm:$0xff]
    %v1263 = vld [vmem:[%s1259 + $0x18] sm:$0xff]
    %v1264 = vld [vmem:[%s1259 + $0x20] sm:$0xff]
    %v1265 = vld [vmem:[%s1259 + $0x28] sm:$0xff]
    %v1266 = vld [vmem:[%s1259 + $0x30] sm:$0xff]
    %v1267 = vld [vmem:[%s1259 + $0x38] sm:$0xff]
    %v1268 = vld [vmem:[%s1259 + $0x40] sm:$0xff]
    %v1269 = vld [vmem:[%s1259 + $0x48] sm:$0xff]
    %v1270 = vld [vmem:[%s1259 + $0x50] sm:$0xff]
    %v1271 = vld [vmem:[%s1259 + $0x58] sm:$0xff]
    %v1272 = vld [vmem:[%s1259 + $0x60] sm:$0xff]
    %v1273 = vld [vmem:[%s1259 + $0x68] sm:$0xff]
    %v1274 = vld [vmem:[%s1259 + $0x70] sm:$0xff]
    %v1275 = vld [vmem:[%s1259 + $0x78] sm:$0xff]
    %v1276 = vlaneseq
    %v1277 = vshrl.u32 %v1276, 7
    %v1278 = vsub.s32 0, %v1277
    %v1279 = vrot.slane %v1183, %v1278
    %1280 = vmatprep.subr.mxu0 0.0
    %1281 = vmatpush1.msra.mxu0 %v1275
    %1282 = vmatprep.subr.mxu0 0.0
    %1283 = vmatpush1.msra.mxu0 %v1274
    %1284 = vmatprep.subr.mxu0 0.0
    %1285 = vmatpush1.msra.mxu0 %v1273
    %1286 = vmatprep.subr.mxu0 0.0
    %1287 = vmatpush1.msra.mxu0 %v1272
    %1288 = vmatprep.subr.mxu0 0.0
    %1289 = vmatpush1.msra.mxu0 %v1271
    %1290 = vmatprep.subr.mxu0 0.0
    %1291 = vmatpush1.msra.mxu0 %v1270
    %1292 = vmatprep.subr.mxu0 0.0
    %1293 = vmatpush1.msra.mxu0 %v1269
    %1294 = vmatprep.subr.mxu0 0.0
    %1295 = vmatpush1.msra.mxu0 %v1268
    %1296 = vmatprep.subr.mxu0 0.0
    %1297 = vmatpush1.msra.mxu0 %v1267
    %1298 = vmatprep.subr.mxu0 0.0
    %1299 = vmatpush1.msra.mxu0 %v1266
    %1300 = vmatprep.subr.mxu0 0.0
    %1301 = vmatpush1.msra.mxu0 %v1265
    %1302 = vmatprep.subr.mxu0 0.0
    %1303 = vmatpush1.msra.mxu0 %v1264
    %1304 = vmatprep.subr.mxu0 0.0
    %1305 = vmatpush1.msra.mxu0 %v1263
    %1306 = vmatprep.subr.mxu0 0.0
    %1307 = vmatpush1.msra.mxu0 %v1262
    %1308 = vmatprep.subr.mxu0 0.0
    %1309 = vmatpush1.msra.mxu0 %v1261
    %1310 = vmatprep.subr.mxu0 0.0
    %1311 = vmatpush1.msra.mxu0 %v1260
    %1312 = vmatprep.subr.mxu0 0.0
    %1313 = vmatpush2.msra.mxu0 0.0
    %1314 = vmatprep.subr.mxu0 0.0
    %1315 = vmatpush2.msra.mxu0 0.0
    %1316 = vmatprep.subr.mxu0 0.0
    %1317 = vmatpush2.msra.mxu0 0.0
    %1318 = vmatprep.subr.mxu0 0.0
    %1319 = vmatpush2.msra.mxu0 0.0
    %1320 = vmatprep.subr.mxu0 0.0
    %1321 = vmatpush2.msra.mxu0 0.0
    %1322 = vmatprep.subr.mxu0 0.0
    %1323 = vmatpush2.msra.mxu0 0.0
    %1324 = vmatprep.subr.mxu0 0.0
    %1325 = vmatpush2.msra.mxu0 0.0
    %1326 = vmatprep.subr.mxu0 0.0
    %1327 = vmatpush2.msra.mxu0 0.0
    %1328 = vmatprep.subr.mxu0 0.0
    %1329 = vmatpush2.msra.mxu0 0.0
    %1330 = vmatprep.subr.mxu0 0.0
    %1331 = vmatpush2.msra.mxu0 0.0
    %1332 = vmatprep.subr.mxu0 0.0
    %1333 = vmatpush2.msra.mxu0 0.0
    %1334 = vmatprep.subr.mxu0 0.0
    %1335 = vmatpush2.msra.mxu0 0.0
    %1336 = vmatprep.subr.mxu0 0.0
    %1337 = vmatpush2.msra.mxu0 0.0
    %1338 = vmatprep.subr.mxu0 0.0
    %1339 = vmatpush2.msra.mxu0 0.0
    %1340 = vmatprep.subr.mxu0 0.0
    %1341 = vmatpush2.msra.mxu0 0.0
    %1342 = vmatprep.subr.mxu0 0.0
    %1343 = vmatpush2.msra.mxu0 0.0
    %1344 = vmatprep.mubr.f32.mxu0 0.0
    %1345 = vmatmul.mubr.f32.gmra.mxu0 %v1251
    %v1346 = vpop.f32.mrf.mxu0
    %v1347 = vadd.f32 %v1279, %v1346
    %v1348 = vpop.f32.mrf.mxu0
    %1349 = vmatprep.mubr.f32.mxu0 0.0
    %1350 = vmatmul.mubr.f32.gmra.mxu0 %v1256
    %v1351 = vpop.f32.mrf.mxu0
    %v1352 = vadd.f32 %v1279, %v1351
    %v1353 = vpop.f32.mrf.mxu0
    %1354 = vdwg.mxu0
    %v1355 = vmax.f32 %v1347, 0.0
    %v1356 = vmax.f32 %v1352, 0.0
    %s1357 = scalar_lea.vmem %s3, 512
    %v1358 = vld [vmem:[%s1357] sm:$0xff]
    %v1359 = vld [vmem:[%s1357 + $0x8] sm:$0xff]
    %v1360 = vld [vmem:[%s1357 + $0x10] sm:$0xff]
    %v1361 = vld [vmem:[%s1357 + $0x18] sm:$0xff]
    %v1362 = vld [vmem:[%s1357 + $0x20] sm:$0xff]
    %v1363 = vld [vmem:[%s1357 + $0x28] sm:$0xff]
    %v1364 = vld [vmem:[%s1357 + $0x30] sm:$0xff]
    %v1365 = vld [vmem:[%s1357 + $0x38] sm:$0xff]
    %v1366 = vld [vmem:[%s1357 + $0x40] sm:$0xff]
    %v1367 = vld [vmem:[%s1357 + $0x48] sm:$0xff]
    %v1368 = vld [vmem:[%s1357 + $0x50] sm:$0xff]
    %v1369 = vld [vmem:[%s1357 + $0x58] sm:$0xff]
    %v1370 = vld [vmem:[%s1357 + $0x60] sm:$0xff]
    %v1371 = vld [vmem:[%s1357 + $0x68] sm:$0xff]
    %v1372 = vld [vmem:[%s1357 + $0x70] sm:$0xff]
    %v1373 = vld [vmem:[%s1357 + $0x78] sm:$0xff]
    %v1374 = vlaneseq
    %v1375 = vshrl.u32 %v1374, 7
    %v1376 = vsub.s32 1, %v1375
    %v1377 = vrot.slane %v1183, %v1376
    %1378 = vmatprep.subr.mxu0 0.0
    %1379 = vmatpush1.msra.mxu0 %v1373
    %1380 = vmatprep.subr.mxu0 0.0
    %1381 = vmatpush1.msra.mxu0 %v1372
    %1382 = vmatprep.subr.mxu0 0.0
    %1383 = vmatpush1.msra.mxu0 %v1371
    %1384 = vmatprep.subr.mxu0 0.0
    %1385 = vmatpush1.msra.mxu0 %v1370
    %1386 = vmatprep.subr.mxu0 0.0
    %1387 = vmatpush1.msra.mxu0 %v1369
    %1388 = vmatprep.subr.mxu0 0.0
    %1389 = vmatpush1.msra.mxu0 %v1368
    %1390 = vmatprep.subr.mxu0 0.0
    %1391 = vmatpush1.msra.mxu0 %v1367
    %1392 = vmatprep.subr.mxu0 0.0
    %1393 = vmatpush1.msra.mxu0 %v1366
    %1394 = vmatprep.subr.mxu0 0.0
    %1395 = vmatpush1.msra.mxu0 %v1365
    %1396 = vmatprep.subr.mxu0 0.0
    %1397 = vmatpush1.msra.mxu0 %v1364
    %1398 = vmatprep.subr.mxu0 0.0
    %1399 = vmatpush1.msra.mxu0 %v1363
    %1400 = vmatprep.subr.mxu0 0.0
    %1401 = vmatpush1.msra.mxu0 %v1362
    %1402 = vmatprep.subr.mxu0 0.0
    %1403 = vmatpush1.msra.mxu0 %v1361
    %1404 = vmatprep.subr.mxu0 0.0
    %1405 = vmatpush1.msra.mxu0 %v1360
    %1406 = vmatprep.subr.mxu0 0.0
    %1407 = vmatpush1.msra.mxu0 %v1359
    %1408 = vmatprep.subr.mxu0 0.0
    %1409 = vmatpush1.msra.mxu0 %v1358
    %1410 = vmatprep.subr.mxu0 0.0
    %1411 = vmatpush2.msra.mxu0 0.0
    %1412 = vmatprep.subr.mxu0 0.0
    %1413 = vmatpush2.msra.mxu0 0.0
    %1414 = vmatprep.subr.mxu0 0.0
    %1415 = vmatpush2.msra.mxu0 0.0
    %1416 = vmatprep.subr.mxu0 0.0
    %1417 = vmatpush2.msra.mxu0 0.0
    %1418 = vmatprep.subr.mxu0 0.0
    %1419 = vmatpush2.msra.mxu0 0.0
    %1420 = vmatprep.subr.mxu0 0.0
    %1421 = vmatpush2.msra.mxu0 0.0
    %1422 = vmatprep.subr.mxu0 0.0
    %1423 = vmatpush2.msra.mxu0 0.0
    %1424 = vmatprep.subr.mxu0 0.0
    %1425 = vmatpush2.msra.mxu0 0.0
    %1426 = vmatprep.subr.mxu0 0.0
    %1427 = vmatpush2.msra.mxu0 0.0
    %1428 = vmatprep.subr.mxu0 0.0
    %1429 = vmatpush2.msra.mxu0 0.0
    %1430 = vmatprep.subr.mxu0 0.0
    %1431 = vmatpush2.msra.mxu0 0.0
    %1432 = vmatprep.subr.mxu0 0.0
    %1433 = vmatpush2.msra.mxu0 0.0
    %1434 = vmatprep.subr.mxu0 0.0
    %1435 = vmatpush2.msra.mxu0 0.0
    %1436 = vmatprep.subr.mxu0 0.0
    %1437 = vmatpush2.msra.mxu0 0.0
    %1438 = vmatprep.subr.mxu0 0.0
    %1439 = vmatpush2.msra.mxu0 0.0
    %1440 = vmatprep.subr.mxu0 0.0
    %1441 = vmatpush2.msra.mxu0 0.0
    %1442 = vmatprep.mubr.f32.mxu0 0.0
    %1443 = vmatmul.mubr.f32.gmra.mxu0 %v1355
    %v1444 = vpop.f32.mrf.mxu0
    %v1445 = vadd.f32 %v1377, %v1444
    %v1446 = vpop.f32.mrf.mxu0
    %1447 = vmatprep.mubr.f32.mxu0 0.0
    %1448 = vmatmul.mubr.f32.gmra.mxu0 %v1356
    %v1449 = vpop.f32.mrf.mxu0
    %v1450 = vadd.f32 %v1377, %v1449
    %v1451 = vpop.f32.mrf.mxu0
    %1452 = vdwg.mxu0
    %v1453 = vmax.f32 %v1445, 0.0
    %v1454 = vmax.f32 %v1450, 0.0
    %v1455 = vlaneseq
    %v1456 = vshrl.u32 %v1455, 7
    %v1457 = vsub.s32 2, %v1456
    %v1458 = vrot.slane %v1183, %v1457
    %v1459 = vmul.f32 %v1453, %v1458
    %v1460 = vmul.f32 %v1454, %v1458
    %v1461 = vlaneseq
    %v1462 = vshrl.u32 %v1461, 7
    %v1463 = vsub.s32 3, %v1462
    %v1464 = vrot.slane %v1183, %v1463
    %v1465 = vadd.f32 %v1459, %v1464
    %v1466 = vadd.f32 %v1460, %v1464
    %1467 = vst [vmem:[%s5] sm:$0xff] %v1465
    %1468 = vst [vmem:[%s5 + $0x8] sm:$0xff] %v1466
    // Predicated region
    $region26: #{gin_mlp_encoder_forward.1} parent=1 // pred_check
      _
    $region27: #{gin_mlp_encoder_forward.1} parent=1 // pred_check_branch
      %1470 = sbr.rel (0) target = $region29
    $region28: #{gin_mlp_encoder_forward.1} parent=1 // pred_region
      _
    $region29: #{gin_mlp_encoder_forward.1} parent=1 // pred_fallthru
      _
    // Predicated region
    $region30: #{gin_mlp_encoder_forward.1} parent=1 // pred_check
      _
    $region31: #{gin_mlp_encoder_forward.1} parent=1 // pred_check_branch
      %1472 = sbr.rel (0) target = $region33
    $region32: #{gin_mlp_encoder_forward.1} parent=1 // pred_region
      _
    $region33: #{gin_mlp_encoder_forward.1} parent=1 // pred_fallthru
      _
    %1473 = vsyncpa [#allocation3], 1

</llo_original>
